<compile_context>
chip_gen: v6e
topology: v6e:2x2x1
jax: 0.10.0
libtpu: 0.0.40
codegen_flags: <defaults>
</compile_context>

<pallas_src>
from math import ceil, floor

import jax
import jax.numpy as jnp
from jax.experimental import pallas as pl
from jax.experimental.pallas import tpu as pltpu


# ----------------------------- model hyper-parameters -----------------------------
B = 2            # batch
CLASSES = 4
C = 8            # num_channels (EEG electrodes)
T = 64           # time_points (must be divisible by 32)
F1 = 8
D = 2
F2 = 16          # == D * F1 (required by the grouped conv in block_3)

K1 = T // 2      # block-1 temporal kernel width
K3 = T // 8      # block-3 depthwise temporal kernel width
T4 = T // 4      # time length after AvgPool(1,4)
T32 = T // 32    # time length after AvgPool(1,8)

P1L, P1R = floor((T - 1) / 4), ceil((T - 1) / 4)      # block-1 ZeroPad2d
P3L, P3R = floor((T - 1) / 16), ceil((T - 1) / 16)    # block-3 ZeroPad2d

BN_EPS = 1e-5

OUT_PAD = 128    # lane-dense padded logits width (>= CLASSES, multiple of 128)
TILE_M = 128     # batch rows per grid step (saturates v5e 128-wide MXU; fine on v6e/v7x)


# --------------------------------- Pallas kernel -----------------------------------
def _elu(v):
    # ELU(alpha=1), computed in f32 on the VPU/EUP (free filler in this HBM-bound kernel).
    return jnp.where(v > 0, v, jnp.exp(jnp.minimum(v, 0.0)) - 1.0)


def _eegnet_fused_kernel(x_ref, w12_ref, w3_ref, w4_ref, bias_ref, out_ref):
    """Whole EEGNet forward (eval mode) as 3 bf16 MXU matmuls + 2 f32 ELUs.

      x_ref   : (TILE_M, C*T)     f32 input tile, batch on sublanes, (c,t) on lanes
      w12_ref : (C*T, F2*T)       bf16: ZeroPad + Conv1 + BN1 + grouped Conv2 + BN2
      w3_ref  : (F2*T, F2*T4)     bf16: AvgPool(1,4) + ZeroPad + depthwise + 1x1 + BN3
      w4_ref  : (F2*T4, OUT_PAD)  bf16: AvgPool(1,8) + flatten + Linear (zero-padded cols)
      bias_ref: (3, F2*T)         f32 packed biases (row0: stage-A, row1: stage-B, row2: Linear)
      out_ref : (TILE_M, OUT_PAD) f32 padded logits
    """
    f32, bf16 = jnp.float32, jnp.bfloat16

    # stage A: block_1 + block_2 conv/BN (pre-ELU), columns laid out as g*T + t
    h1 = jnp.dot(x_ref[...].astype(bf16), w12_ref[...], preferred_element_type=f32)
    h1 = _elu(h1 + bias_ref[0:1, :])                              # (TILE_M, F2*T)

    # stage B: AvgPool(1,4) + block_3 depthwise+pointwise conv + BN3 (pre-ELU),
    # columns laid out as h*T4 + t'
    h2 = jnp.dot(h1.astype(bf16), w3_ref[...], preferred_element_type=f32)
    h2 = _elu(h2 + bias_ref[1:2, :F2 * T4])                       # (TILE_M, F2*T4)

    # stage C: AvgPool(1,8) + flatten + Linear (zero-padded to 128 lanes)
    out_ref[...] = (jnp.dot(h2.astype(bf16), w4_ref[...], preferred_element_type=f32)
                    + bias_ref[2:3, :OUT_PAD])                    # (TILE_M, OUT_PAD)


def eegnet_forward(x, fused):
    """x: (N, 1, C, T) float32 in NCHW, matching the PyTorch module."""
    n = x.shape[0]
    xf = x.reshape(n, C * T).astype(jnp.float32)      # contiguous, metadata-only reshape

    # batch tile: TILE_M for large batches, otherwise the smallest multiple of 8 >= n
    tm = TILE_M if n >= TILE_M else max(8, -(-n // 8) * 8)
    n_pad = -(-n // tm) * tm
    if n_pad != n:
        xf = jnp.pad(xf, ((0, n_pad - n), (0, 0)))

    flops = 2 * n_pad * (C * T * F2 * T + F2 * T * F2 * T4 + F2 * T4 * OUT_PAD)
    transcendentals = n_pad * (F2 * T + F2 * T4)
    bytes_accessed = (2 * (fused["w12"].size + fused["w3"].size + fused["w4"].size)  # bf16
                      + 4 * fused["bias"].size                                       # f32
                      + 4 * xf.size + 4 * n_pad * OUT_PAD)

    out = pl.pallas_call(
        _eegnet_fused_kernel,
        out_shape=jax.ShapeDtypeStruct((n_pad, OUT_PAD), jnp.float32),
        grid=(n_pad // tm,),
        in_specs=[
            pl.BlockSpec((tm, C * T), lambda i: (i, 0)),          # x tile (double-buffered)
            pl.BlockSpec((C * T, F2 * T), lambda i: (0, 0)),      # weights: fetched once,
            pl.BlockSpec((F2 * T, F2 * T4), lambda i: (0, 0)),    # VMEM-resident across
            pl.BlockSpec((F2 * T4, OUT_PAD), lambda i: (0, 0)),   # all grid steps
            pl.BlockSpec((3, F2 * T), lambda i: (0, 0)),          # packed biases
        ],
        out_specs=pl.BlockSpec((tm, OUT_PAD), lambda i: (i, 0)),  # lane-dense store
        compiler_params=pltpu.CompilerParams(
            dimension_semantics=("parallel",)),                   # v7x: split tiles over 2 TCs
        cost_estimate=pl.CostEstimate(
            flops=flops, transcendentals=transcendentals, bytes_accessed=bytes_accessed),
    )(xf, fused["w12"], fused["w3"], fused["w4"], fused["bias"])
    return out[:n, :CLASSES]


# --------------------------- host-side weight fusion --------------------------------
def fuse_params(p):
    """Fold conv kernels, ZeroPad2d, AvgPool, eval-mode BN and the Linear into the
    three dense operators consumed by the kernel (pure weight preprocessing)."""
    f32, bf16 = jnp.float32, jnp.bfloat16
    fg = jnp.arange(F2) // D                     # output channel g -> block-2 group f

    # ---- stage A: ZeroPad(P1) + Conv2d(1,F1,(1,K1)) + BN1 + Conv2d(F1,F2,(C,1),groups=F1) + BN2
    j = jnp.arange(T)[:, None]                   # input time index
    t = jnp.arange(T)[None, :]                   # output time index
    k1 = j - t + P1L                             # conv tap index; pad zeros => invalid taps
    toep1 = jnp.where((k1 >= 0) & (k1 < K1),
                      p["w1"][:, jnp.clip(k1, 0, K1 - 1)], 0.0)   # (F1, T, T) [f, j, t]
    w2s = (p["s2"] * p["s1"][fg])[:, None] * p["w2"]              # (F2, C)    BN scales folded
    w12 = jnp.einsum("gc,gjt->cjgt", w2s, toep1[fg]).reshape(C * T, F2 * T)
    bias2 = p["s2"] * p["b1"][fg] * p["w2"].sum(axis=1) + p["b2"]           # (F2,)

    # ---- stage B: AvgPool(1,4) + ZeroPad(P3) + depthwise Conv(1,K3) + 1x1 Conv + BN3
    u4 = jnp.arange(T) // 4                      # pre-pool time t -> pooled index
    k3 = u4[:, None] - jnp.arange(T4)[None, :] + P3L              # (T, T4) tap index
    toep3 = jnp.where((k3 >= 0) & (k3 < K3),
                      0.25 * p["w3"][:, jnp.clip(k3, 0, K3 - 1)], 0.0)      # (F2, T, T4)
    w4s = p["s3"][:, None] * p["w4"]                              # (F2, F2) [h, g]
    w3m = jnp.einsum("hg,gtu->gthu", w4s, toep3).reshape(F2 * T, F2 * T4)
    bias3 = p["b3"]                                               # (F2,)

    # ---- stage C: AvgPool(1,8) + flatten (channel-major) + Linear, padded to 128 lanes
    u8 = jnp.arange(T4) // 8
    w4m = (0.125 * p["w_out"].reshape(CLASSES, F2, T32)[:, :, u8]  # (CLASSES, F2, T4)
           ).transpose(1, 2, 0).reshape(F2 * T4, CLASSES)
    w4p = jnp.zeros((F2 * T4, OUT_PAD), f32).at[:, :CLASSES].set(w4m)

    bias_pack = jnp.zeros((3, F2 * T), f32)
    bias_pack = bias_pack.at[0].set(jnp.repeat(bias2, T))             # column g*T + t
    bias_pack = bias_pack.at[1, :F2 * T4].set(jnp.repeat(bias3, T4))  # column h*T4 + t'
    bias_pack = bias_pack.at[2, :CLASSES].set(p["b_out"])
    # bf16 weights (MXU-native, halves the HBM weight stream); biases stay f32.
    return dict(w12=w12.astype(bf16), w3=w3m.astype(bf16),
                w4=w4p.astype(bf16), bias=bias_pack)


# ------------------------------ deterministic params -------------------------------
def init_raw_params(key):
    f32 = jnp.float32
    ks = jax.random.split(key, 9)

    w1 = 0.2 * jax.random.normal(ks[0], (F1, K1), f32)        # Conv2d(1, F1, (1, K1))
    w2 = 0.2 * jax.random.normal(ks[1], (F2, C), f32)         # Conv2d(F1, F2, (C, 1), groups=F1)
    w3 = 0.2 * jax.random.normal(ks[2], (F2, K3), f32)        # Conv2d(F2, F2, (1, K3), groups=F2)
    w4 = 0.2 * jax.random.normal(ks[3], (F2, F2), f32)        # Conv2d(F2, F2, (1, 1))
    w_out = 0.2 * jax.random.normal(ks[4], (CLASSES, F2 * T32), f32)
    b_out = 0.1 * jax.random.normal(ks[5], (CLASSES,), f32)

    def bn_affine(k, n):                                      # eval-mode BatchNorm fold
        kg, kb, km, kv = jax.random.split(k, 4)
        gamma = 1.0 + 0.1 * jax.random.normal(kg, (n,), f32)
        beta = 0.1 * jax.random.normal(kb, (n,), f32)
        mean = 0.1 * jax.random.normal(km, (n,), f32)
        var = 1.0 + 0.1 * jax.random.uniform(kv, (n,), f32)
        scale = gamma / jnp.sqrt(var + BN_EPS)
        return scale, beta - mean * scale

    s1, b1 = bn_affine(ks[6], F1)
    s2, b2 = bn_affine(ks[7], F2)
    s3, b3 = bn_affine(ks[8], F2)
    return dict(w1=w1, w2=w2, w3=w3, w4=w4, w_out=w_out, b_out=b_out,
                s1=s1, b1=b1, s2=s2, b2=b2, s3=s3, b3=b3)


# ------------------------- pure-JAX reference of the PyTorch net --------------------
def reference_forward(x, p):
    hi = jax.lax.Precision.HIGHEST
    n = x.shape[0]
    # block_1: ZeroPad2d + Conv2d(1, F1, (1, K1)) + BatchNorm2d
    xp = jnp.pad(x[:, 0], ((0, 0), (0, 0), (P1L, P1R)))               # (B, C, T+P1L+P1R)
    out1 = jnp.zeros((n, F1, C, T), jnp.float32)
    for k in range(K1):
        out1 = out1 + p["w1"][None, :, None, k:k + 1] * xp[:, None, :, k:k + T]
    y1 = p["s1"][None, :, None, None] * out1 + p["b1"][None, :, None, None]
    # block_2: grouped spatial conv + BN + ELU + AvgPool(1,4)  (Dropout = identity, eval)
    fg = jnp.arange(F2) // D
    out2 = jnp.einsum("gc,bgct->bgt", p["w2"], y1[:, fg], precision=hi)
    y2 = p["s2"][None, :, None] * out2 + p["b2"][None, :, None]
    e2 = jnp.where(y2 > 0, y2, jnp.exp(jnp.minimum(y2, 0.0)) - 1.0)
    p2 = e2.reshape(n, F2, T4, 4).mean(-1)
    # block_3: ZeroPad + depthwise conv + 1x1 conv + BN + ELU + AvgPool(1,8)
    p2p = jnp.pad(p2, ((0, 0), (0, 0), (P3L, P3R)))
    out3 = jnp.zeros((n, F2, T4), jnp.float32)
    for k in range(K3):
        out3 = out3 + p["w3"][None, :, k:k + 1] * p2p[:, :, k:k + T4]
    out4 = jnp.einsum("hg,bgt->bht", p["w4"], out3, precision=hi)
    y3 = p["s3"][None, :, None] * out4 + p["b3"][None, :, None]
    e3 = jnp.where(y3 > 0, y3, jnp.exp(jnp.minimum(y3, 0.0)) - 1.0)
    p3 = e3.reshape(n, F2, T32, 8).mean(-1)
    # flatten (channel-major, as torch .view) + Linear
    flat = p3.reshape(n, F2 * T32)
    return jnp.dot(flat, p["w_out"].T, precision=hi) + p["b_out"][None, :]


if __name__ == "__main__":
    key = jax.random.PRNGKey(0)
    pkey, xkey = jax.random.split(key)
    raw = init_raw_params(pkey)
    fused = fuse_params(raw)
    x = jax.random.normal(xkey, (B, 1, C, T), jnp.float32)

    logits = jax.jit(eegnet_forward)(x, fused)
    jax.block_until_ready(logits)
    assert logits.shape == (B, CLASSES) and logits.dtype == jnp.float32

    ref = reference_forward(x, raw)
    max_err = float(jnp.max(jnp.abs(logits - ref)))
    assert jnp.allclose(logits, ref, atol=1e-2, rtol=1e-2), f"max abs diff {max_err}"
    print("KERNEL_OK")
</pallas_src>

<mosaic_0001>
module attributes {stable_mosaic.version = 11 : i64} {
  func.func @_eegnet_fused_kernel(%arg0: i32, %arg1: memref<8x512xf32, #tpu.memory_space<vmem>>, %arg2: memref<512x1024xbf16, #tpu.memory_space<vmem>>, %arg3: memref<1024x256xbf16, #tpu.memory_space<vmem>>, %arg4: memref<256x128xbf16, #tpu.memory_space<vmem>>, %arg5: memref<3x1024xf32, #tpu.memory_space<vmem>>, %arg6: memref<8x128xf32, #tpu.memory_space<vmem>>) attributes {dimension_semantics = [#tpu.dimension_semantics<parallel>], iteration_bounds = array<i64: 1>, scalar_prefetch = 0 : i64, scratch_operands = 0 : i64, tpu.core_type = #tpu.core_type<tc>, window_params = [{transform_indices = @transform_0, window_bounds = array<i64: 8, 512>}, {pipeline_mode = #tpu.pipeline_mode<synchronous>, transform_indices = @transform_1, window_bounds = array<i64: 512, 1024>}, {pipeline_mode = #tpu.pipeline_mode<synchronous>, transform_indices = @transform_2, window_bounds = array<i64: 1024, 256>}, {pipeline_mode = #tpu.pipeline_mode<synchronous>, transform_indices = @transform_3, window_bounds = array<i64: 256, 128>}, {pipeline_mode = #tpu.pipeline_mode<synchronous>, transform_indices = @transform_4, window_bounds = array<i64: 3, 1024>}, {transform_indices = @transform_5, window_bounds = array<i64: 8, 128>}]} {
    %c0 = arith.constant 0 : index
    %c0_0 = arith.constant 0 : index
    %0 = vector.load %arg1[%c0, %c0_0] : memref<8x512xf32, #tpu.memory_space<vmem>>, vector<8x512xf32>
    %1 = arith.truncf %0 : vector<8x512xf32> to vector<8x512xbf16>
    %c0_1 = arith.constant 0 : index
    %c0_2 = arith.constant 0 : index
    %2 = vector.load %arg2[%c0_1, %c0_2] : memref<512x1024xbf16, #tpu.memory_space<vmem>>, vector<512x1024xbf16>
    %cst = arith.constant dense<0.000000e+00> : vector<8x1024xf32>
    %3 = tpu.matmul %1, %2, %cst {dimension_numbers = #tpu.dot_dimension_numbers<[1], [0], [0], [1], [0, 0, 1, 1], [], []>} : vector<8x512xbf16>, vector<512x1024xbf16>, vector<8x1024xf32> -> vector<8x1024xf32>
    %c0_3 = arith.constant 0 : index
    %c0_4 = arith.constant 0 : index
    %4 = vector.load %arg5[%c0_3, %c0_4] : memref<3x1024xf32, #tpu.memory_space<vmem>>, vector<1x1024xf32>
    %5 = vector.broadcast %4 : vector<1x1024xf32> to vector<8x1024xf32>
    %6 = arith.addf %3, %5 : vector<8x1024xf32>
    %cst_5 = arith.constant 0.000000e+00 : f32
    %7 = vector.broadcast %cst_5 : f32 to vector<8x1024xf32>
    %8 = arith.cmpf ogt, %6, %7 : vector<8x1024xf32>
    %cst_6 = arith.constant 0.000000e+00 : f32
    %9 = vector.broadcast %cst_6 : f32 to vector<8x1024xf32>
    %10 = arith.minimumf %6, %9 : vector<8x1024xf32>
    %11 = math.exp %10 : vector<8x1024xf32>
    %cst_7 = arith.constant 1.000000e+00 : f32
    %12 = vector.broadcast %cst_7 : f32 to vector<8x1024xf32>
    %13 = arith.subf %11, %12 : vector<8x1024xf32>
    %14 = arith.select %8, %6, %13 : vector<8x1024xi1>, vector<8x1024xf32>
    %15 = arith.truncf %14 : vector<8x1024xf32> to vector<8x1024xbf16>
    %c0_8 = arith.constant 0 : index
    %c0_9 = arith.constant 0 : index
    %16 = vector.load %arg3[%c0_8, %c0_9] : memref<1024x256xbf16, #tpu.memory_space<vmem>>, vector<1024x256xbf16>
    %cst_10 = arith.constant dense<0.000000e+00> : vector<8x256xf32>
    %17 = tpu.matmul %15, %16, %cst_10 {dimension_numbers = #tpu.dot_dimension_numbers<[1], [0], [0], [1], [0, 0, 1, 1], [], []>} : vector<8x1024xbf16>, vector<1024x256xbf16>, vector<8x256xf32> -> vector<8x256xf32>
    %c1 = arith.constant 1 : index
    %c0_11 = arith.constant 0 : index
    %18 = vector.load %arg5[%c1, %c0_11] : memref<3x1024xf32, #tpu.memory_space<vmem>>, vector<1x256xf32>
    %19 = vector.broadcast %18 : vector<1x256xf32> to vector<8x256xf32>
    %20 = arith.addf %17, %19 : vector<8x256xf32>
    %cst_12 = arith.constant 0.000000e+00 : f32
    %21 = vector.broadcast %cst_12 : f32 to vector<8x256xf32>
    %22 = arith.cmpf ogt, %20, %21 : vector<8x256xf32>
    %cst_13 = arith.constant 0.000000e+00 : f32
    %23 = vector.broadcast %cst_13 : f32 to vector<8x256xf32>
    %24 = arith.minimumf %20, %23 : vector<8x256xf32>
    %25 = math.exp %24 : vector<8x256xf32>
    %cst_14 = arith.constant 1.000000e+00 : f32
    %26 = vector.broadcast %cst_14 : f32 to vector<8x256xf32>
    %27 = arith.subf %25, %26 : vector<8x256xf32>
    %28 = arith.select %22, %20, %27 : vector<8x256xi1>, vector<8x256xf32>
    %29 = arith.truncf %28 : vector<8x256xf32> to vector<8x256xbf16>
    %c0_15 = arith.constant 0 : index
    %c0_16 = arith.constant 0 : index
    %30 = vector.load %arg4[%c0_15, %c0_16] : memref<256x128xbf16, #tpu.memory_space<vmem>>, vector<256x128xbf16>
    %cst_17 = arith.constant dense<0.000000e+00> : vector<8x128xf32>
    %31 = tpu.matmul %29, %30, %cst_17 {dimension_numbers = #tpu.dot_dimension_numbers<[1], [0], [0], [1], [0, 0, 1, 1], [], []>} : vector<8x256xbf16>, vector<256x128xbf16>, vector<8x128xf32> -> vector<8x128xf32>
    %c2 = arith.constant 2 : index
    %c0_18 = arith.constant 0 : index
    %32 = vector.load %arg5[%c2, %c0_18] : memref<3x1024xf32, #tpu.memory_space<vmem>>, vector<1x128xf32>
    %33 = vector.broadcast %32 : vector<1x128xf32> to vector<8x128xf32>
    %34 = arith.addf %31, %33 : vector<8x128xf32>
    %c0_19 = arith.constant 0 : index
    %c0_20 = arith.constant 0 : index
    %35 = vector.load %arg6[%c0_19, %c0_20] : memref<8x128xf32, #tpu.memory_space<vmem>>, vector<8x128xf32>
    tpu.vector_store %arg6[%c0_19, %c0_20], %34 {strides = array<i32>} : memref<8x128xf32, #tpu.memory_space<vmem>>, vector<8x128xf32>,
    return
  }
  func.func @transform_0(%arg0: i32) -> (i32, i32) {
    %c0_i32 = arith.constant 0 : i32
    %c0_i32_0 = arith.constant 0 : i32
    return %arg0, %c0_i32 : i32, i32
  }
  func.func @transform_1(%arg0: i32) -> (i32, i32) {
    %c0_i32 = arith.constant 0 : i32
    %c0_i32_0 = arith.constant 0 : i32
    %c0_i32_1 = arith.constant 0 : i32
    return %c0_i32, %c0_i32_0 : i32, i32
  }
  func.func @transform_2(%arg0: i32) -> (i32, i32) {
    %c0_i32 = arith.constant 0 : i32
    %c0_i32_0 = arith.constant 0 : i32
    %c0_i32_1 = arith.constant 0 : i32
    return %c0_i32, %c0_i32_0 : i32, i32
  }
  func.func @transform_3(%arg0: i32) -> (i32, i32) {
    %c0_i32 = arith.constant 0 : i32
    %c0_i32_0 = arith.constant 0 : i32
    %c0_i32_1 = arith.constant 0 : i32
    return %c0_i32, %c0_i32_0 : i32, i32
  }
  func.func @transform_4(%arg0: i32) -> (i32, i32) {
    %c0_i32 = arith.constant 0 : i32
    %c0_i32_0 = arith.constant 0 : i32
    %c0_i32_1 = arith.constant 0 : i32
    return %c0_i32, %c0_i32_0 : i32, i32
  }
  func.func @transform_5(%arg0: i32) -> (i32, i32) {
    %c0_i32 = arith.constant 0 : i32
    %c0_i32_0 = arith.constant 0 : i32
    return %arg0, %c0_i32 : i32, i32
  }
}

</mosaic_0001>

<llo_original>
// kernel: eegnet_forward.1
$region0: #{eegnet_forward.1}
  #allocation0 [shape = 'u32[]', space=smem, size = 0x4, offset = 0x4, fixed_abs, tag = 'smem constant byte address 0x4 - core index']
  #allocation1 [shape = 'u32[144,128]{1,0:T(1,128)}', space=vmem, size = 0x12000, scoped, tag = 'internal scratch']
  %s0 = inlined_call_operand.vmem [shape: f32[8,512], index: 0, kind: input, shape index: {}]
  %s1 = inlined_call_operand.hbm [shape: bf16[512,1024], index: 1, kind: input, shape index: {}]
  %s2 = inlined_call_operand.hbm [shape: bf16[1024,256], index: 2, kind: input, shape index: {}]
  %s3 = inlined_call_operand.hbm [shape: bf16[256,128], index: 3, kind: input, shape index: {}]
  %s4 = inlined_call_operand.vmem [shape: f32[3,1024], index: 4, kind: input, shape index: {}]
  %s5 = inlined_call_operand.vmem [shape: f32[8,128], index: 5, kind: output, shape index: {}]
  %s6 = sld [smem:[#allocation0]]
  $region42: #{eegnet_forward.1} parent=0
    _
  %s8 = ssub.s32 1, %s6
  %s9 = scalar_select 0, %s8, %s6
  $region1: #{eegnet_forward.1} parent=0
    #allocation2 [shape = 'u8[1048576]{0}', space=vmem, size = 0x100000, scoped, tag = 'input window, operand 1, single buffered']
    #allocation3 [shape = 's32[1]{0}', space=sflag, size = 0x4, scoped, tag = 'scoped memory for eegnet_forward.1']
    #allocation4 [shape = 'u8[524288]{0}', space=vmem, size = 0x80000, scoped, tag = 'input window, operand 2, single buffered']
    #allocation5 [shape = 's32[1]{0}', space=sflag, size = 0x4, scoped, tag = 'scoped memory for eegnet_forward.1']
    #allocation6 [shape = 'u8[65536]{0}', space=vmem, size = 0x10000, scoped, tag = 'input window, operand 3, single buffered']
    %10 = vsyncpa [#allocation3], 0
    %11 = vsyncpa [#allocation5], 0
    // Predicated region
    $region2: #{eegnet_forward.1} parent=1 // pred_check
      _
    $region3: #{eegnet_forward.1} parent=1 // pred_check_branch
      %13 = sbr.rel (0) target = $region5
    $region4: #{eegnet_forward.1} parent=1 // pred_region
      _
    $region5: #{eegnet_forward.1} parent=1 // pred_fallthru
      _
    // Predicated region
    $region6: #{eegnet_forward.1} parent=1 // pred_check
      _
    $region7: #{eegnet_forward.1} parent=1 // pred_check_branch
      %15 = sbr.rel (0) target = $region9
    $region8: #{eegnet_forward.1} parent=1 // pred_region
      %s17 = ssub.s32 32768, 32768
      %18 = vsyncadd [#allocation3], %s17
      %s19 = sshll.u32 [#allocation2], 4
      %s20 = int_to_ptr.vmem [resolvable:$true] %s19
      %25 = dma.hbm_to_vmem [thread:$0]  %s1, 32768, %s20, [#allocation3], 512, 512, 32
    $region9: #{eegnet_forward.1} parent=1 // pred_fallthru
      _
    // Predicated region
    $region10: #{eegnet_forward.1} parent=1 // pred_check
      _
    $region11: #{eegnet_forward.1} parent=1 // pred_check_branch
      %27 = sbr.rel (0) target = $region13
    $region12: #{eegnet_forward.1} parent=1 // pred_region
      %s29 = ssub.s32 16384, 16384
      %30 = vsyncadd [#allocation5], %s29
      %s31 = sshll.u32 [#allocation4], 4
      %s32 = int_to_ptr.vmem [resolvable:$true] %s31
      %37 = dma.hbm_to_vmem [thread:$0]  %s2, 16384, %s32, [#allocation5], 128, 128, 8
    $region13: #{eegnet_forward.1} parent=1 // pred_fallthru
      _
    // Predicated region
    $region14: #{eegnet_forward.1} parent=1 // pred_check
      _
    $region15: #{eegnet_forward.1} parent=1 // pred_check_branch
      %39 = sbr.rel (0) target = $region17
    $region16: #{eegnet_forward.1} parent=1 // pred_region
      %s41 = ssub.s32 2048, 2048
      %42 = vsyncadd [#allocation5], %s41
      %s43 = sshll.u32 [#allocation6], 4
      %s44 = int_to_ptr.vmem [resolvable:$true] %s43
      %49 = dma.hbm_to_vmem [thread:$0]  %s3, 2048, %s44, [#allocation5], 64, 64, 4
    $region17: #{eegnet_forward.1} parent=1 // pred_fallthru
      _
    // Predicated region
    $region18: #{eegnet_forward.1} parent=1 // pred_check
      _
    $region19: #{eegnet_forward.1} parent=1 // pred_check_branch
      %51 = sbr.rel (0) target = $region21
    $region20: #{eegnet_forward.1} parent=1 // pred_region
      _
    $region21: #{eegnet_forward.1} parent=1 // pred_fallthru
      _
    // Predicated region
    $region22: #{eegnet_forward.1} parent=1 // pred_check
      _
    $region23: #{eegnet_forward.1} parent=1 // pred_check_branch
      %53 = sbr.rel (0) target = $region25
    $region24: #{eegnet_forward.1} parent=1 // pred_region
      %54 = dma.done [#allocation3], 32768
    $region25: #{eegnet_forward.1} parent=1 // pred_fallthru
      _
    // Predicated region
    $region26: #{eegnet_forward.1} parent=1 // pred_check
      _
    $region27: #{eegnet_forward.1} parent=1 // pred_check_branch
      %56 = sbr.rel (0) target = $region29
    $region28: #{eegnet_forward.1} parent=1 // pred_region
      %57 = dma.done [#allocation5], 16384
    $region29: #{eegnet_forward.1} parent=1 // pred_fallthru
      _
    // Predicated region
    $region30: #{eegnet_forward.1} parent=1 // pred_check
      _
    $region31: #{eegnet_forward.1} parent=1 // pred_check_branch
      %59 = sbr.rel (0) target = $region33
    $region32: #{eegnet_forward.1} parent=1 // pred_region
      %60 = dma.done [#allocation5], 2048
    $region33: #{eegnet_forward.1} parent=1 // pred_fallthru
      _
    %v62 = vld [vmem:[%s0] sm:$0xff]
    %v63 = vld [vmem:[%s0 + $0x8] sm:$0xff]
    %v64 = vld [vmem:[%s0 + $0x10] sm:$0xff]
    %v65 = vld [vmem:[%s0 + $0x18] sm:$0xff]
    %v66 = vpack.c.bf16 %v62, %v62
    %v67 = vpack.c.bf16 %v63, %v63
    %v68 = vpack.c.bf16 %v64, %v64
    %v69 = vpack.c.bf16 %v65, %v65
    %v70 = vld [vmem:[#allocation2] sm:$0xff]
    %v71 = vld [vmem:[#allocation2 + $0x8] sm:$0xff]
    %v72 = vld [vmem:[#allocation2 + $0x10] sm:$0xff]
    %v73 = vld [vmem:[#allocation2 + $0x18] sm:$0xff]
    %v74 = vld [vmem:[#allocation2 + $0x20] sm:$0xff]
    %v75 = vld [vmem:[#allocation2 + $0x28] sm:$0xff]
    %v76 = vld [vmem:[#allocation2 + $0x30] sm:$0xff]
    %v77 = vld [vmem:[#allocation2 + $0x38] sm:$0xff]
    %v78 = vld [vmem:[#allocation2 + $0x40] sm:$0xff]
    %v79 = vld [vmem:[#allocation2 + $0x48] sm:$0xff]
    %v80 = vld [vmem:[#allocation2 + $0x50] sm:$0xff]
    %v81 = vld [vmem:[#allocation2 + $0x58] sm:$0xff]
    %v82 = vld [vmem:[#allocation2 + $0x60] sm:$0xff]
    %v83 = vld [vmem:[#allocation2 + $0x68] sm:$0xff]
    %v84 = vld [vmem:[#allocation2 + $0x70] sm:$0xff]
    %v85 = vld [vmem:[#allocation2 + $0x78] sm:$0xff]
    %v86 = vld [vmem:[#allocation2 + $0x80] sm:$0xff]
    %v87 = vld [vmem:[#allocation2 + $0x88] sm:$0xff]
    %v88 = vld [vmem:[#allocation2 + $0x90] sm:$0xff]
    %v89 = vld [vmem:[#allocation2 + $0x98] sm:$0xff]
    %v90 = vld [vmem:[#allocation2 + $0xa0] sm:$0xff]
    %v91 = vld [vmem:[#allocation2 + $0xa8] sm:$0xff]
    %v92 = vld [vmem:[#allocation2 + $0xb0] sm:$0xff]
    %v93 = vld [vmem:[#allocation2 + $0xb8] sm:$0xff]
    %v94 = vld [vmem:[#allocation2 + $0xc0] sm:$0xff]
    %v95 = vld [vmem:[#allocation2 + $0xc8] sm:$0xff]
    %v96 = vld [vmem:[#allocation2 + $0xd0] sm:$0xff]
    %v97 = vld [vmem:[#allocation2 + $0xd8] sm:$0xff]
    %v98 = vld [vmem:[#allocation2 + $0xe0] sm:$0xff]
    %v99 = vld [vmem:[#allocation2 + $0xe8] sm:$0xff]
    %v100 = vld [vmem:[#allocation2 + $0xf0] sm:$0xff]
    %v101 = vld [vmem:[#allocation2 + $0xf8] sm:$0xff]
    %v102 = vld [vmem:[#allocation2 + $0x100] sm:$0xff]
    %v103 = vld [vmem:[#allocation2 + $0x108] sm:$0xff]
    %v104 = vld [vmem:[#allocation2 + $0x110] sm:$0xff]
    %v105 = vld [vmem:[#allocation2 + $0x118] sm:$0xff]
    %v106 = vld [vmem:[#allocation2 + $0x120] sm:$0xff]
    %v107 = vld [vmem:[#allocation2 + $0x128] sm:$0xff]
    %v108 = vld [vmem:[#allocation2 + $0x130] sm:$0xff]
    %v109 = vld [vmem:[#allocation2 + $0x138] sm:$0xff]
    %v110 = vld [vmem:[#allocation2 + $0x140] sm:$0xff]
    %v111 = vld [vmem:[#allocation2 + $0x148] sm:$0xff]
    %v112 = vld [vmem:[#allocation2 + $0x150] sm:$0xff]
    %v113 = vld [vmem:[#allocation2 + $0x158] sm:$0xff]
    %v114 = vld [vmem:[#allocation2 + $0x160] sm:$0xff]
    %v115 = vld [vmem:[#allocation2 + $0x168] sm:$0xff]
    %v116 = vld [vmem:[#allocation2 + $0x170] sm:$0xff]
    %v117 = vld [vmem:[#allocation2 + $0x178] sm:$0xff]
    %v118 = vld [vmem:[#allocation2 + $0x180] sm:$0xff]
    %v119 = vld [vmem:[#allocation2 + $0x188] sm:$0xff]
    %v120 = vld [vmem:[#allocation2 + $0x190] sm:$0xff]
    %v121 = vld [vmem:[#allocation2 + $0x198] sm:$0xff]
    %v122 = vld [vmem:[#allocation2 + $0x1a0] sm:$0xff]
    %v123 = vld [vmem:[#allocation2 + $0x1a8] sm:$0xff]
    %v124 = vld [vmem:[#allocation2 + $0x1b0] sm:$0xff]
    %v125 = vld [vmem:[#allocation2 + $0x1b8] sm:$0xff]
    %v126 = vld [vmem:[#allocation2 + $0x1c0] sm:$0xff]
    %v127 = vld [vmem:[#allocation2 + $0x1c8] sm:$0xff]
    %v128 = vld [vmem:[#allocation2 + $0x1d0] sm:$0xff]
    %v129 = vld [vmem:[#allocation2 + $0x1d8] sm:$0xff]
    %v130 = vld [vmem:[#allocation2 + $0x1e0] sm:$0xff]
    %v131 = vld [vmem:[#allocation2 + $0x1e8] sm:$0xff]
    %v132 = vld [vmem:[#allocation2 + $0x1f0] sm:$0xff]
    %v133 = vld [vmem:[#allocation2 + $0x1f8] sm:$0xff]
    %v134 = vld [vmem:[#allocation2 + $0x200] sm:$0xff]
    %v135 = vld [vmem:[#allocation2 + $0x208] sm:$0xff]
    %v136 = vld [vmem:[#allocation2 + $0x210] sm:$0xff]
    %v137 = vld [vmem:[#allocation2 + $0x218] sm:$0xff]
    %v138 = vld [vmem:[#allocation2 + $0x220] sm:$0xff]
    %v139 = vld [vmem:[#allocation2 + $0x228] sm:$0xff]
    %v140 = vld [vmem:[#allocation2 + $0x230] sm:$0xff]
    %v141 = vld [vmem:[#allocation2 + $0x238] sm:$0xff]
    %v142 = vld [vmem:[#allocation2 + $0x240] sm:$0xff]
    %v143 = vld [vmem:[#allocation2 + $0x248] sm:$0xff]
    %v144 = vld [vmem:[#allocation2 + $0x250] sm:$0xff]
    %v145 = vld [vmem:[#allocation2 + $0x258] sm:$0xff]
    %v146 = vld [vmem:[#allocation2 + $0x260] sm:$0xff]
    %v147 = vld [vmem:[#allocation2 + $0x268] sm:$0xff]
    %v148 = vld [vmem:[#allocation2 + $0x270] sm:$0xff]
    %v149 = vld [vmem:[#allocation2 + $0x278] sm:$0xff]
    %v150 = vld [vmem:[#allocation2 + $0x280] sm:$0xff]
    %v151 = vld [vmem:[#allocation2 + $0x288] sm:$0xff]
    %v152 = vld [vmem:[#allocation2 + $0x290] sm:$0xff]
    %v153 = vld [vmem:[#allocation2 + $0x298] sm:$0xff]
    %v154 = vld [vmem:[#allocation2 + $0x2a0] sm:$0xff]
    %v155 = vld [vmem:[#allocation2 + $0x2a8] sm:$0xff]
    %v156 = vld [vmem:[#allocation2 + $0x2b0] sm:$0xff]
    %v157 = vld [vmem:[#allocation2 + $0x2b8] sm:$0xff]
    %v158 = vld [vmem:[#allocation2 + $0x2c0] sm:$0xff]
    %v159 = vld [vmem:[#allocation2 + $0x2c8] sm:$0xff]
    %v160 = vld [vmem:[#allocation2 + $0x2d0] sm:$0xff]
    %v161 = vld [vmem:[#allocation2 + $0x2d8] sm:$0xff]
    %v162 = vld [vmem:[#allocation2 + $0x2e0] sm:$0xff]
    %v163 = vld [vmem:[#allocation2 + $0x2e8] sm:$0xff]
    %v164 = vld [vmem:[#allocation2 + $0x2f0] sm:$0xff]
    %v165 = vld [vmem:[#allocation2 + $0x2f8] sm:$0xff]
    %v166 = vld [vmem:[#allocation2 + $0x300] sm:$0xff]
    %v167 = vld [vmem:[#allocation2 + $0x308] sm:$0xff]
    %v168 = vld [vmem:[#allocation2 + $0x310] sm:$0xff]
    %v169 = vld [vmem:[#allocation2 + $0x318] sm:$0xff]
    %v170 = vld [vmem:[#allocation2 + $0x320] sm:$0xff]
    %v171 = vld [vmem:[#allocation2 + $0x328] sm:$0xff]
    %v172 = vld [vmem:[#allocation2 + $0x330] sm:$0xff]
    %v173 = vld [vmem:[#allocation2 + $0x338] sm:$0xff]
    %v174 = vld [vmem:[#allocation2 + $0x340] sm:$0xff]
    %v175 = vld [vmem:[#allocation2 + $0x348] sm:$0xff]
    %v176 = vld [vmem:[#allocation2 + $0x350] sm:$0xff]
    %v177 = vld [vmem:[#allocation2 + $0x358] sm:$0xff]
    %v178 = vld [vmem:[#allocation2 + $0x360] sm:$0xff]
    %v179 = vld [vmem:[#allocation2 + $0x368] sm:$0xff]
    %v180 = vld [vmem:[#allocation2 + $0x370] sm:$0xff]
    %v181 = vld [vmem:[#allocation2 + $0x378] sm:$0xff]
    %v182 = vld [vmem:[#allocation2 + $0x380] sm:$0xff]
    %v183 = vld [vmem:[#allocation2 + $0x388] sm:$0xff]
    %v184 = vld [vmem:[#allocation2 + $0x390] sm:$0xff]
    %v185 = vld [vmem:[#allocation2 + $0x398] sm:$0xff]
    %v186 = vld [vmem:[#allocation2 + $0x3a0] sm:$0xff]
    %v187 = vld [vmem:[#allocation2 + $0x3a8] sm:$0xff]
    %v188 = vld [vmem:[#allocation2 + $0x3b0] sm:$0xff]
    %v189 = vld [vmem:[#allocation2 + $0x3b8] sm:$0xff]
    %v190 = vld [vmem:[#allocation2 + $0x3c0] sm:$0xff]
    %v191 = vld [vmem:[#allocation2 + $0x3c8] sm:$0xff]
    %v192 = vld [vmem:[#allocation2 + $0x3d0] sm:$0xff]
    %v193 = vld [vmem:[#allocation2 + $0x3d8] sm:$0xff]
    %v194 = vld [vmem:[#allocation2 + $0x3e0] sm:$0xff]
    %v195 = vld [vmem:[#allocation2 + $0x3e8] sm:$0xff]
    %v196 = vld [vmem:[#allocation2 + $0x3f0] sm:$0xff]
    %v197 = vld [vmem:[#allocation2 + $0x3f8] sm:$0xff]
    %v198 = vld [vmem:[#allocation2 + $0x400] sm:$0xff]
    %v199 = vld [vmem:[#allocation2 + $0x408] sm:$0xff]
    %v200 = vld [vmem:[#allocation2 + $0x410] sm:$0xff]
    %v201 = vld [vmem:[#allocation2 + $0x418] sm:$0xff]
    %v202 = vld [vmem:[#allocation2 + $0x420] sm:$0xff]
    %v203 = vld [vmem:[#allocation2 + $0x428] sm:$0xff]
    %v204 = vld [vmem:[#allocation2 + $0x430] sm:$0xff]
    %v205 = vld [vmem:[#allocation2 + $0x438] sm:$0xff]
    %v206 = vld [vmem:[#allocation2 + $0x440] sm:$0xff]
    %v207 = vld [vmem:[#allocation2 + $0x448] sm:$0xff]
    %v208 = vld [vmem:[#allocation2 + $0x450] sm:$0xff]
    %v209 = vld [vmem:[#allocation2 + $0x458] sm:$0xff]
    %v210 = vld [vmem:[#allocation2 + $0x460] sm:$0xff]
    %v211 = vld [vmem:[#allocation2 + $0x468] sm:$0xff]
    %v212 = vld [vmem:[#allocation2 + $0x470] sm:$0xff]
    %v213 = vld [vmem:[#allocation2 + $0x478] sm:$0xff]
    %v214 = vld [vmem:[#allocation2 + $0x480] sm:$0xff]
    %v215 = vld [vmem:[#allocation2 + $0x488] sm:$0xff]
    %v216 = vld [vmem:[#allocation2 + $0x490] sm:$0xff]
    %v217 = vld [vmem:[#allocation2 + $0x498] sm:$0xff]
    %v218 = vld [vmem:[#allocation2 + $0x4a0] sm:$0xff]
    %v219 = vld [vmem:[#allocation2 + $0x4a8] sm:$0xff]
    %v220 = vld [vmem:[#allocation2 + $0x4b0] sm:$0xff]
    %v221 = vld [vmem:[#allocation2 + $0x4b8] sm:$0xff]
    %v222 = vld [vmem:[#allocation2 + $0x4c0] sm:$0xff]
    %v223 = vld [vmem:[#allocation2 + $0x4c8] sm:$0xff]
    %v224 = vld [vmem:[#allocation2 + $0x4d0] sm:$0xff]
    %v225 = vld [vmem:[#allocation2 + $0x4d8] sm:$0xff]
    %v226 = vld [vmem:[#allocation2 + $0x4e0] sm:$0xff]
    %v227 = vld [vmem:[#allocation2 + $0x4e8] sm:$0xff]
    %v228 = vld [vmem:[#allocation2 + $0x4f0] sm:$0xff]
    %v229 = vld [vmem:[#allocation2 + $0x4f8] sm:$0xff]
    %v230 = vld [vmem:[#allocation2 + $0x500] sm:$0xff]
    %v231 = vld [vmem:[#allocation2 + $0x508] sm:$0xff]
    %v232 = vld [vmem:[#allocation2 + $0x510] sm:$0xff]
    %v233 = vld [vmem:[#allocation2 + $0x518] sm:$0xff]
    %v234 = vld [vmem:[#allocation2 + $0x520] sm:$0xff]
    %v235 = vld [vmem:[#allocation2 + $0x528] sm:$0xff]
    %v236 = vld [vmem:[#allocation2 + $0x530] sm:$0xff]
    %v237 = vld [vmem:[#allocation2 + $0x538] sm:$0xff]
    %v238 = vld [vmem:[#allocation2 + $0x540] sm:$0xff]
    %v239 = vld [vmem:[#allocation2 + $0x548] sm:$0xff]
    %v240 = vld [vmem:[#allocation2 + $0x550] sm:$0xff]
    %v241 = vld [vmem:[#allocation2 + $0x558] sm:$0xff]
    %v242 = vld [vmem:[#allocation2 + $0x560] sm:$0xff]
    %v243 = vld [vmem:[#allocation2 + $0x568] sm:$0xff]
    %v244 = vld [vmem:[#allocation2 + $0x570] sm:$0xff]
    %v245 = vld [vmem:[#allocation2 + $0x578] sm:$0xff]
    %v246 = vld [vmem:[#allocation2 + $0x580] sm:$0xff]
    %v247 = vld [vmem:[#allocation2 + $0x588] sm:$0xff]
    %v248 = vld [vmem:[#allocation2 + $0x590] sm:$0xff]
    %v249 = vld [vmem:[#allocation2 + $0x598] sm:$0xff]
    %v250 = vld [vmem:[#allocation2 + $0x5a0] sm:$0xff]
    %v251 = vld [vmem:[#allocation2 + $0x5a8] sm:$0xff]
    %v252 = vld [vmem:[#allocation2 + $0x5b0] sm:$0xff]
    %v253 = vld [vmem:[#allocation2 + $0x5b8] sm:$0xff]
    %v254 = vld [vmem:[#allocation2 + $0x5c0] sm:$0xff]
    %v255 = vld [vmem:[#allocation2 + $0x5c8] sm:$0xff]
    %v256 = vld [vmem:[#allocation2 + $0x5d0] sm:$0xff]
    %v257 = vld [vmem:[#allocation2 + $0x5d8] sm:$0xff]
    %v258 = vld [vmem:[#allocation2 + $0x5e0] sm:$0xff]
    %v259 = vld [vmem:[#allocation2 + $0x5e8] sm:$0xff]
    %v260 = vld [vmem:[#allocation2 + $0x5f0] sm:$0xff]
    %v261 = vld [vmem:[#allocation2 + $0x5f8] sm:$0xff]
    %v262 = vld [vmem:[#allocation2 + $0x600] sm:$0xff]
    %v263 = vld [vmem:[#allocation2 + $0x608] sm:$0xff]
    %v264 = vld [vmem:[#allocation2 + $0x610] sm:$0xff]
    %v265 = vld [vmem:[#allocation2 + $0x618] sm:$0xff]
    %v266 = vld [vmem:[#allocation2 + $0x620] sm:$0xff]
    %v267 = vld [vmem:[#allocation2 + $0x628] sm:$0xff]
    %v268 = vld [vmem:[#allocation2 + $0x630] sm:$0xff]
    %v269 = vld [vmem:[#allocation2 + $0x638] sm:$0xff]
    %v270 = vld [vmem:[#allocation2 + $0x640] sm:$0xff]
    %v271 = vld [vmem:[#allocation2 + $0x648] sm:$0xff]
    %v272 = vld [vmem:[#allocation2 + $0x650] sm:$0xff]
    %v273 = vld [vmem:[#allocation2 + $0x658] sm:$0xff]
    %v274 = vld [vmem:[#allocation2 + $0x660] sm:$0xff]
    %v275 = vld [vmem:[#allocation2 + $0x668] sm:$0xff]
    %v276 = vld [vmem:[#allocation2 + $0x670] sm:$0xff]
    %v277 = vld [vmem:[#allocation2 + $0x678] sm:$0xff]
    %v278 = vld [vmem:[#allocation2 + $0x680] sm:$0xff]
    %v279 = vld [vmem:[#allocation2 + $0x688] sm:$0xff]
    %v280 = vld [vmem:[#allocation2 + $0x690] sm:$0xff]
    %v281 = vld [vmem:[#allocation2 + $0x698] sm:$0xff]
    %v282 = vld [vmem:[#allocation2 + $0x6a0] sm:$0xff]
    %v283 = vld [vmem:[#allocation2 + $0x6a8] sm:$0xff]
    %v284 = vld [vmem:[#allocation2 + $0x6b0] sm:$0xff]
    %v285 = vld [vmem:[#allocation2 + $0x6b8] sm:$0xff]
    %v286 = vld [vmem:[#allocation2 + $0x6c0] sm:$0xff]
    %v287 = vld [vmem:[#allocation2 + $0x6c8] sm:$0xff]
    %v288 = vld [vmem:[#allocation2 + $0x6d0] sm:$0xff]
    %v289 = vld [vmem:[#allocation2 + $0x6d8] sm:$0xff]
    %v290 = vld [vmem:[#allocation2 + $0x6e0] sm:$0xff]
    %v291 = vld [vmem:[#allocation2 + $0x6e8] sm:$0xff]
    %v292 = vld [vmem:[#allocation2 + $0x6f0] sm:$0xff]
    %v293 = vld [vmem:[#allocation2 + $0x6f8] sm:$0xff]
    %v294 = vld [vmem:[#allocation2 + $0x700] sm:$0xff]
    %v295 = vld [vmem:[#allocation2 + $0x708] sm:$0xff]
    %v296 = vld [vmem:[#allocation2 + $0x710] sm:$0xff]
    %v297 = vld [vmem:[#allocation2 + $0x718] sm:$0xff]
    %v298 = vld [vmem:[#allocation2 + $0x720] sm:$0xff]
    %v299 = vld [vmem:[#allocation2 + $0x728] sm:$0xff]
    %v300 = vld [vmem:[#allocation2 + $0x730] sm:$0xff]
    %v301 = vld [vmem:[#allocation2 + $0x738] sm:$0xff]
    %v302 = vld [vmem:[#allocation2 + $0x740] sm:$0xff]
    %v303 = vld [vmem:[#allocation2 + $0x748] sm:$0xff]
    %v304 = vld [vmem:[#allocation2 + $0x750] sm:$0xff]
    %v305 = vld [vmem:[#allocation2 + $0x758] sm:$0xff]
    %v306 = vld [vmem:[#allocation2 + $0x760] sm:$0xff]
    %v307 = vld [vmem:[#allocation2 + $0x768] sm:$0xff]
    %v308 = vld [vmem:[#allocation2 + $0x770] sm:$0xff]
    %v309 = vld [vmem:[#allocation2 + $0x778] sm:$0xff]
    %v310 = vld [vmem:[#allocation2 + $0x780] sm:$0xff]
    %v311 = vld [vmem:[#allocation2 + $0x788] sm:$0xff]
    %v312 = vld [vmem:[#allocation2 + $0x790] sm:$0xff]
    %v313 = vld [vmem:[#allocation2 + $0x798] sm:$0xff]
    %v314 = vld [vmem:[#allocation2 + $0x7a0] sm:$0xff]
    %v315 = vld [vmem:[#allocation2 + $0x7a8] sm:$0xff]
    %v316 = vld [vmem:[#allocation2 + $0x7b0] sm:$0xff]
    %v317 = vld [vmem:[#allocation2 + $0x7b8] sm:$0xff]
    %v318 = vld [vmem:[#allocation2 + $0x7c0] sm:$0xff]
    %v319 = vld [vmem:[#allocation2 + $0x7c8] sm:$0xff]
    %v320 = vld [vmem:[#allocation2 + $0x7d0] sm:$0xff]
    %v321 = vld [vmem:[#allocation2 + $0x7d8] sm:$0xff]
    %v322 = vld [vmem:[#allocation2 + $0x7e0] sm:$0xff]
    %v323 = vld [vmem:[#allocation2 + $0x7e8] sm:$0xff]
    %v324 = vld [vmem:[#allocation2 + $0x7f0] sm:$0xff]
    %v325 = vld [vmem:[#allocation2 + $0x7f8] sm:$0xff]
    %v326 = vld [vmem:[%s4] ss:$4 sm:$0xff]
    %v328 = vlaneseq
    %v329 = vshrl.u32 %v328, 7
    %v330 = vsub.s32 0, %v329
    %v331 = vrot.slane %v326, %v330
    %v332 = vlaneseq
    %v333 = vshrl.u32 %v332, 7
    %v334 = vsub.s32 1, %v333
    %v335 = vrot.slane %v326, %v334
    %v336 = vlaneseq
    %v337 = vshrl.u32 %v336, 7
    %v338 = vsub.s32 2, %v337
    %v339 = vrot.slane %v326, %v338
    %v340 = vlaneseq
    %v341 = vshrl.u32 %v340, 7
    %v342 = vsub.s32 3, %v341
    %v343 = vrot.slane %v326, %v342
    %v344 = vlaneseq
    %v345 = vshrl.u32 %v344, 7
    %v346 = vsub.s32 4, %v345
    %v347 = vrot.slane %v326, %v346
    %v348 = vlaneseq
    %v349 = vshrl.u32 %v348, 7
    %v350 = vsub.s32 5, %v349
    %v351 = vrot.slane %v326, %v350
    %v352 = vlaneseq
    %v353 = vshrl.u32 %v352, 7
    %v354 = vsub.s32 6, %v353
    %v355 = vrot.slane %v326, %v354
    %v356 = vlaneseq
    %v357 = vshrl.u32 %v356, 7
    %v358 = vsub.s32 7, %v357
    %v359 = vrot.slane %v326, %v358
    %v624 = vunpack.c.l.b16 %v70
    %v625 = vunpack.c.h.b16 %v70
    %v626 = vunpack.c.l.b16 %v71
    %v627 = vunpack.c.h.b16 %v71
    %v628 = vunpack.c.l.b16 %v72
    %v629 = vunpack.c.h.b16 %v72
    %v630 = vunpack.c.l.b16 %v73
    %v631 = vunpack.c.h.b16 %v73
    %v632 = vunpack.c.l.b16 %v74
    %v633 = vunpack.c.h.b16 %v74
    %v634 = vunpack.c.l.b16 %v75
    %v635 = vunpack.c.h.b16 %v75
    %v636 = vunpack.c.l.b16 %v76
    %v637 = vunpack.c.h.b16 %v76
    %v638 = vunpack.c.l.b16 %v77
    %v639 = vunpack.c.h.b16 %v77
    %v640 = vunpack.c.l.b16 %v78
    %v641 = vunpack.c.h.b16 %v78
    %v642 = vunpack.c.l.b16 %v79
    %v643 = vunpack.c.h.b16 %v79
    %v644 = vunpack.c.l.b16 %v80
    %v645 = vunpack.c.h.b16 %v80
    %v646 = vunpack.c.l.b16 %v81
    %v647 = vunpack.c.h.b16 %v81
    %v648 = vunpack.c.l.b16 %v82
    %v649 = vunpack.c.h.b16 %v82
    %v650 = vunpack.c.l.b16 %v83
    %v651 = vunpack.c.h.b16 %v83
    %v652 = vunpack.c.l.b16 %v84
    %v653 = vunpack.c.h.b16 %v84
    %v654 = vunpack.c.l.b16 %v85
    %v655 = vunpack.c.h.b16 %v85
    %v656 = vunpack.c.l.b16 %v86
    %v657 = vunpack.c.h.b16 %v86
    %v658 = vunpack.c.l.b16 %v87
    %v659 = vunpack.c.h.b16 %v87
    %v660 = vunpack.c.l.b16 %v88
    %v661 = vunpack.c.h.b16 %v88
    %v662 = vunpack.c.l.b16 %v89
    %v663 = vunpack.c.h.b16 %v89
    %v664 = vunpack.c.l.b16 %v90
    %v665 = vunpack.c.h.b16 %v90
    %v666 = vunpack.c.l.b16 %v91
    %v667 = vunpack.c.h.b16 %v91
    %v668 = vunpack.c.l.b16 %v92
    %v669 = vunpack.c.h.b16 %v92
    %v670 = vunpack.c.l.b16 %v93
    %v671 = vunpack.c.h.b16 %v93
    %v672 = vunpack.c.l.b16 %v94
    %v673 = vunpack.c.h.b16 %v94
    %v674 = vunpack.c.l.b16 %v95
    %v675 = vunpack.c.h.b16 %v95
    %v676 = vunpack.c.l.b16 %v96
    %v677 = vunpack.c.h.b16 %v96
    %v678 = vunpack.c.l.b16 %v97
    %v679 = vunpack.c.h.b16 %v97
    %v680 = vunpack.c.l.b16 %v98
    %v681 = vunpack.c.h.b16 %v98
    %v682 = vunpack.c.l.b16 %v99
    %v683 = vunpack.c.h.b16 %v99
    %v684 = vunpack.c.l.b16 %v100
    %v685 = vunpack.c.h.b16 %v100
    %v686 = vunpack.c.l.b16 %v101
    %v687 = vunpack.c.h.b16 %v101
    %v688 = vunpack.c.l.b16 %v102
    %v689 = vunpack.c.h.b16 %v102
    %v690 = vunpack.c.l.b16 %v103
    %v691 = vunpack.c.h.b16 %v103
    %v692 = vunpack.c.l.b16 %v104
    %v693 = vunpack.c.h.b16 %v104
    %v694 = vunpack.c.l.b16 %v105
    %v695 = vunpack.c.h.b16 %v105
    %v696 = vunpack.c.l.b16 %v106
    %v697 = vunpack.c.h.b16 %v106
    %v698 = vunpack.c.l.b16 %v107
    %v699 = vunpack.c.h.b16 %v107
    %v700 = vunpack.c.l.b16 %v108
    %v701 = vunpack.c.h.b16 %v108
    %v702 = vunpack.c.l.b16 %v109
    %v703 = vunpack.c.h.b16 %v109
    %v704 = vunpack.c.l.b16 %v110
    %v705 = vunpack.c.h.b16 %v110
    %v706 = vunpack.c.l.b16 %v111
    %v707 = vunpack.c.h.b16 %v111
    %v708 = vunpack.c.l.b16 %v112
    %v709 = vunpack.c.h.b16 %v112
    %v710 = vunpack.c.l.b16 %v113
    %v711 = vunpack.c.h.b16 %v113
    %v712 = vunpack.c.l.b16 %v114
    %v713 = vunpack.c.h.b16 %v114
    %v714 = vunpack.c.l.b16 %v115
    %v715 = vunpack.c.h.b16 %v115
    %v716 = vunpack.c.l.b16 %v116
    %v717 = vunpack.c.h.b16 %v116
    %v718 = vunpack.c.l.b16 %v117
    %v719 = vunpack.c.h.b16 %v117
    %v720 = vunpack.c.l.b16 %v118
    %v721 = vunpack.c.h.b16 %v118
    %v722 = vunpack.c.l.b16 %v119
    %v723 = vunpack.c.h.b16 %v119
    %v724 = vunpack.c.l.b16 %v120
    %v725 = vunpack.c.h.b16 %v120
    %v726 = vunpack.c.l.b16 %v121
    %v727 = vunpack.c.h.b16 %v121
    %v728 = vunpack.c.l.b16 %v122
    %v729 = vunpack.c.h.b16 %v122
    %v730 = vunpack.c.l.b16 %v123
    %v731 = vunpack.c.h.b16 %v123
    %v732 = vunpack.c.l.b16 %v124
    %v733 = vunpack.c.h.b16 %v124
    %v734 = vunpack.c.l.b16 %v125
    %v735 = vunpack.c.h.b16 %v125
    %v736 = vunpack.c.l.b16 %v126
    %v737 = vunpack.c.h.b16 %v126
    %v738 = vunpack.c.l.b16 %v127
    %v739 = vunpack.c.h.b16 %v127
    %v740 = vunpack.c.l.b16 %v128
    %v741 = vunpack.c.h.b16 %v128
    %v742 = vunpack.c.l.b16 %v129
    %v743 = vunpack.c.h.b16 %v129
    %v744 = vunpack.c.l.b16 %v130
    %v745 = vunpack.c.h.b16 %v130
    %v746 = vunpack.c.l.b16 %v131
    %v747 = vunpack.c.h.b16 %v131
    %v748 = vunpack.c.l.b16 %v132
    %v749 = vunpack.c.h.b16 %v132
    %v750 = vunpack.c.l.b16 %v133
    %v751 = vunpack.c.h.b16 %v133
    %v752 = vunpack.c.l.b16 %v134
    %v753 = vunpack.c.h.b16 %v134
    %v754 = vunpack.c.l.b16 %v135
    %v755 = vunpack.c.h.b16 %v135
    %v756 = vunpack.c.l.b16 %v136
    %v757 = vunpack.c.h.b16 %v136
    %v758 = vunpack.c.l.b16 %v137
    %v759 = vunpack.c.h.b16 %v137
    %v760 = vunpack.c.l.b16 %v138
    %v761 = vunpack.c.h.b16 %v138
    %v762 = vunpack.c.l.b16 %v139
    %v763 = vunpack.c.h.b16 %v139
    %v764 = vunpack.c.l.b16 %v140
    %v765 = vunpack.c.h.b16 %v140
    %v766 = vunpack.c.l.b16 %v141
    %v767 = vunpack.c.h.b16 %v141
    %v768 = vunpack.c.l.b16 %v142
    %v769 = vunpack.c.h.b16 %v142
    %v770 = vunpack.c.l.b16 %v143
    %v771 = vunpack.c.h.b16 %v143
    %v772 = vunpack.c.l.b16 %v144
    %v773 = vunpack.c.h.b16 %v144
    %v774 = vunpack.c.l.b16 %v145
    %v775 = vunpack.c.h.b16 %v145
    %v776 = vunpack.c.l.b16 %v146
    %v777 = vunpack.c.h.b16 %v146
    %v778 = vunpack.c.l.b16 %v147
    %v779 = vunpack.c.h.b16 %v147
    %v780 = vunpack.c.l.b16 %v148
    %v781 = vunpack.c.h.b16 %v148
    %v782 = vunpack.c.l.b16 %v149
    %v783 = vunpack.c.h.b16 %v149
    %v784 = vunpack.c.l.b16 %v150
    %v785 = vunpack.c.h.b16 %v150
    %v786 = vunpack.c.l.b16 %v151
    %v787 = vunpack.c.h.b16 %v151
    %v788 = vunpack.c.l.b16 %v152
    %v789 = vunpack.c.h.b16 %v152
    %v790 = vunpack.c.l.b16 %v153
    %v791 = vunpack.c.h.b16 %v153
    %v792 = vunpack.c.l.b16 %v154
    %v793 = vunpack.c.h.b16 %v154
    %v794 = vunpack.c.l.b16 %v155
    %v795 = vunpack.c.h.b16 %v155
    %v796 = vunpack.c.l.b16 %v156
    %v797 = vunpack.c.h.b16 %v156
    %v798 = vunpack.c.l.b16 %v157
    %v799 = vunpack.c.h.b16 %v157
    %v800 = vunpack.c.l.b16 %v158
    %v801 = vunpack.c.h.b16 %v158
    %v802 = vunpack.c.l.b16 %v159
    %v803 = vunpack.c.h.b16 %v159
    %v804 = vunpack.c.l.b16 %v160
    %v805 = vunpack.c.h.b16 %v160
    %v806 = vunpack.c.l.b16 %v161
    %v807 = vunpack.c.h.b16 %v161
    %v808 = vunpack.c.l.b16 %v162
    %v809 = vunpack.c.h.b16 %v162
    %v810 = vunpack.c.l.b16 %v163
    %v811 = vunpack.c.h.b16 %v163
    %v812 = vunpack.c.l.b16 %v164
    %v813 = vunpack.c.h.b16 %v164
    %v814 = vunpack.c.l.b16 %v165
    %v815 = vunpack.c.h.b16 %v165
    %v816 = vunpack.c.l.b16 %v166
    %v817 = vunpack.c.h.b16 %v166
    %v818 = vunpack.c.l.b16 %v167
    %v819 = vunpack.c.h.b16 %v167
    %v820 = vunpack.c.l.b16 %v168
    %v821 = vunpack.c.h.b16 %v168
    %v822 = vunpack.c.l.b16 %v169
    %v823 = vunpack.c.h.b16 %v169
    %v824 = vunpack.c.l.b16 %v170
    %v825 = vunpack.c.h.b16 %v170
    %v826 = vunpack.c.l.b16 %v171
    %v827 = vunpack.c.h.b16 %v171
    %v828 = vunpack.c.l.b16 %v172
    %v829 = vunpack.c.h.b16 %v172
    %v830 = vunpack.c.l.b16 %v173
    %v831 = vunpack.c.h.b16 %v173
    %v832 = vunpack.c.l.b16 %v174
    %v833 = vunpack.c.h.b16 %v174
    %v834 = vunpack.c.l.b16 %v175
    %v835 = vunpack.c.h.b16 %v175
    %v836 = vunpack.c.l.b16 %v176
    %v837 = vunpack.c.h.b16 %v176
    %v838 = vunpack.c.l.b16 %v177
    %v839 = vunpack.c.h.b16 %v177
    %v840 = vunpack.c.l.b16 %v178
    %v841 = vunpack.c.h.b16 %v178
    %v842 = vunpack.c.l.b16 %v179
    %v843 = vunpack.c.h.b16 %v179
    %v844 = vunpack.c.l.b16 %v180
    %v845 = vunpack.c.h.b16 %v180
    %v846 = vunpack.c.l.b16 %v181
    %v847 = vunpack.c.h.b16 %v181
    %v848 = vunpack.c.l.b16 %v182
    %v849 = vunpack.c.h.b16 %v182
    %v850 = vunpack.c.l.b16 %v183
    %v851 = vunpack.c.h.b16 %v183
    %v852 = vunpack.c.l.b16 %v184
    %v853 = vunpack.c.h.b16 %v184
    %v854 = vunpack.c.l.b16 %v185
    %v855 = vunpack.c.h.b16 %v185
    %v856 = vunpack.c.l.b16 %v186
    %v857 = vunpack.c.h.b16 %v186
    %v858 = vunpack.c.l.b16 %v187
    %v859 = vunpack.c.h.b16 %v187
    %v860 = vunpack.c.l.b16 %v188
    %v861 = vunpack.c.h.b16 %v188
    %v862 = vunpack.c.l.b16 %v189
    %v863 = vunpack.c.h.b16 %v189
    %v864 = vunpack.c.l.b16 %v190
    %v865 = vunpack.c.h.b16 %v190
    %v866 = vunpack.c.l.b16 %v191
    %v867 = vunpack.c.h.b16 %v191
    %v868 = vunpack.c.l.b16 %v192
    %v869 = vunpack.c.h.b16 %v192
    %v870 = vunpack.c.l.b16 %v193
    %v871 = vunpack.c.h.b16 %v193
    %v872 = vunpack.c.l.b16 %v194
    %v873 = vunpack.c.h.b16 %v194
    %v874 = vunpack.c.l.b16 %v195
    %v875 = vunpack.c.h.b16 %v195
    %v876 = vunpack.c.l.b16 %v196
    %v877 = vunpack.c.h.b16 %v196
    %v878 = vunpack.c.l.b16 %v197
    %v879 = vunpack.c.h.b16 %v197
    %v880 = vunpack.c.l.b16 %v198
    %v881 = vunpack.c.h.b16 %v198
    %v882 = vunpack.c.l.b16 %v199
    %v883 = vunpack.c.h.b16 %v199
    %v884 = vunpack.c.l.b16 %v200
    %v885 = vunpack.c.h.b16 %v200
    %v886 = vunpack.c.l.b16 %v201
    %v887 = vunpack.c.h.b16 %v201
    %v888 = vunpack.c.l.b16 %v202
    %v889 = vunpack.c.h.b16 %v202
    %v890 = vunpack.c.l.b16 %v203
    %v891 = vunpack.c.h.b16 %v203
    %v892 = vunpack.c.l.b16 %v204
    %v893 = vunpack.c.h.b16 %v204
    %v894 = vunpack.c.l.b16 %v205
    %v895 = vunpack.c.h.b16 %v205
    %v896 = vunpack.c.l.b16 %v206
    %v897 = vunpack.c.h.b16 %v206
    %v898 = vunpack.c.l.b16 %v207
    %v899 = vunpack.c.h.b16 %v207
    %v900 = vunpack.c.l.b16 %v208
    %v901 = vunpack.c.h.b16 %v208
    %v902 = vunpack.c.l.b16 %v209
    %v903 = vunpack.c.h.b16 %v209
    %v904 = vunpack.c.l.b16 %v210
    %v905 = vunpack.c.h.b16 %v210
    %v906 = vunpack.c.l.b16 %v211
    %v907 = vunpack.c.h.b16 %v211
    %v908 = vunpack.c.l.b16 %v212
    %v909 = vunpack.c.h.b16 %v212
    %v910 = vunpack.c.l.b16 %v213
    %v911 = vunpack.c.h.b16 %v213
    %v912 = vunpack.c.l.b16 %v214
    %v913 = vunpack.c.h.b16 %v214
    %v914 = vunpack.c.l.b16 %v215
    %v915 = vunpack.c.h.b16 %v215
    %v916 = vunpack.c.l.b16 %v216
    %v917 = vunpack.c.h.b16 %v216
    %v918 = vunpack.c.l.b16 %v217
    %v919 = vunpack.c.h.b16 %v217
    %v920 = vunpack.c.l.b16 %v218
    %v921 = vunpack.c.h.b16 %v218
    %v922 = vunpack.c.l.b16 %v219
    %v923 = vunpack.c.h.b16 %v219
    %v924 = vunpack.c.l.b16 %v220
    %v925 = vunpack.c.h.b16 %v220
    %v926 = vunpack.c.l.b16 %v221
    %v927 = vunpack.c.h.b16 %v221
    %v928 = vunpack.c.l.b16 %v222
    %v929 = vunpack.c.h.b16 %v222
    %v930 = vunpack.c.l.b16 %v223
    %v931 = vunpack.c.h.b16 %v223
    %v932 = vunpack.c.l.b16 %v224
    %v933 = vunpack.c.h.b16 %v224
    %v934 = vunpack.c.l.b16 %v225
    %v935 = vunpack.c.h.b16 %v225
    %v936 = vunpack.c.l.b16 %v226
    %v937 = vunpack.c.h.b16 %v226
    %v938 = vunpack.c.l.b16 %v227
    %v939 = vunpack.c.h.b16 %v227
    %v940 = vunpack.c.l.b16 %v228
    %v941 = vunpack.c.h.b16 %v228
    %v942 = vunpack.c.l.b16 %v229
    %v943 = vunpack.c.h.b16 %v229
    %v944 = vunpack.c.l.b16 %v230
    %v945 = vunpack.c.h.b16 %v230
    %v946 = vunpack.c.l.b16 %v231
    %v947 = vunpack.c.h.b16 %v231
    %v948 = vunpack.c.l.b16 %v232
    %v949 = vunpack.c.h.b16 %v232
    %v950 = vunpack.c.l.b16 %v233
    %v951 = vunpack.c.h.b16 %v233
    %v952 = vunpack.c.l.b16 %v234
    %v953 = vunpack.c.h.b16 %v234
    %v954 = vunpack.c.l.b16 %v235
    %v955 = vunpack.c.h.b16 %v235
    %v956 = vunpack.c.l.b16 %v236
    %v957 = vunpack.c.h.b16 %v236
    %v958 = vunpack.c.l.b16 %v237
    %v959 = vunpack.c.h.b16 %v237
    %v960 = vunpack.c.l.b16 %v238
    %v961 = vunpack.c.h.b16 %v238
    %v962 = vunpack.c.l.b16 %v239
    %v963 = vunpack.c.h.b16 %v239
    %v964 = vunpack.c.l.b16 %v240
    %v965 = vunpack.c.h.b16 %v240
    %v966 = vunpack.c.l.b16 %v241
    %v967 = vunpack.c.h.b16 %v241
    %v968 = vunpack.c.l.b16 %v242
    %v969 = vunpack.c.h.b16 %v242
    %v970 = vunpack.c.l.b16 %v243
    %v971 = vunpack.c.h.b16 %v243
    %v972 = vunpack.c.l.b16 %v244
    %v973 = vunpack.c.h.b16 %v244
    %v974 = vunpack.c.l.b16 %v245
    %v975 = vunpack.c.h.b16 %v245
    %v976 = vunpack.c.l.b16 %v246
    %v977 = vunpack.c.h.b16 %v246
    %v978 = vunpack.c.l.b16 %v247
    %v979 = vunpack.c.h.b16 %v247
    %v980 = vunpack.c.l.b16 %v248
    %v981 = vunpack.c.h.b16 %v248
    %v982 = vunpack.c.l.b16 %v249
    %v983 = vunpack.c.h.b16 %v249
    %v984 = vunpack.c.l.b16 %v250
    %v985 = vunpack.c.h.b16 %v250
    %v986 = vunpack.c.l.b16 %v251
    %v987 = vunpack.c.h.b16 %v251
    %v988 = vunpack.c.l.b16 %v252
    %v989 = vunpack.c.h.b16 %v252
    %v990 = vunpack.c.l.b16 %v253
    %v991 = vunpack.c.h.b16 %v253
    %v992 = vunpack.c.l.b16 %v254
    %v993 = vunpack.c.h.b16 %v254
    %v994 = vunpack.c.l.b16 %v255
    %v995 = vunpack.c.h.b16 %v255
    %v996 = vunpack.c.l.b16 %v256
    %v997 = vunpack.c.h.b16 %v256
    %v998 = vunpack.c.l.b16 %v257
    %v999 = vunpack.c.h.b16 %v257
    %v1000 = vunpack.c.l.b16 %v258
    %v1001 = vunpack.c.h.b16 %v258
    %v1002 = vunpack.c.l.b16 %v259
    %v1003 = vunpack.c.h.b16 %v259
    %v1004 = vunpack.c.l.b16 %v260
    %v1005 = vunpack.c.h.b16 %v260
    %v1006 = vunpack.c.l.b16 %v261
    %v1007 = vunpack.c.h.b16 %v261
    %v1008 = vunpack.c.l.b16 %v262
    %v1009 = vunpack.c.h.b16 %v262
    %v1010 = vunpack.c.l.b16 %v263
    %v1011 = vunpack.c.h.b16 %v263
    %v1012 = vunpack.c.l.b16 %v264
    %v1013 = vunpack.c.h.b16 %v264
    %v1014 = vunpack.c.l.b16 %v265
    %v1015 = vunpack.c.h.b16 %v265
    %v1016 = vunpack.c.l.b16 %v266
    %v1017 = vunpack.c.h.b16 %v266
    %v1018 = vunpack.c.l.b16 %v267
    %v1019 = vunpack.c.h.b16 %v267
    %v1020 = vunpack.c.l.b16 %v268
    %v1021 = vunpack.c.h.b16 %v268
    %v1022 = vunpack.c.l.b16 %v269
    %v1023 = vunpack.c.h.b16 %v269
    %v1024 = vunpack.c.l.b16 %v270
    %v1025 = vunpack.c.h.b16 %v270
    %v1026 = vunpack.c.l.b16 %v271
    %v1027 = vunpack.c.h.b16 %v271
    %v1028 = vunpack.c.l.b16 %v272
    %v1029 = vunpack.c.h.b16 %v272
    %v1030 = vunpack.c.l.b16 %v273
    %v1031 = vunpack.c.h.b16 %v273
    %v1032 = vunpack.c.l.b16 %v274
    %v1033 = vunpack.c.h.b16 %v274
    %v1034 = vunpack.c.l.b16 %v275
    %v1035 = vunpack.c.h.b16 %v275
    %v1036 = vunpack.c.l.b16 %v276
    %v1037 = vunpack.c.h.b16 %v276
    %v1038 = vunpack.c.l.b16 %v277
    %v1039 = vunpack.c.h.b16 %v277
    %v1040 = vunpack.c.l.b16 %v278
    %v1041 = vunpack.c.h.b16 %v278
    %v1042 = vunpack.c.l.b16 %v279
    %v1043 = vunpack.c.h.b16 %v279
    %v1044 = vunpack.c.l.b16 %v280
    %v1045 = vunpack.c.h.b16 %v280
    %v1046 = vunpack.c.l.b16 %v281
    %v1047 = vunpack.c.h.b16 %v281
    %v1048 = vunpack.c.l.b16 %v282
    %v1049 = vunpack.c.h.b16 %v282
    %v1050 = vunpack.c.l.b16 %v283
    %v1051 = vunpack.c.h.b16 %v283
    %v1052 = vunpack.c.l.b16 %v284
    %v1053 = vunpack.c.h.b16 %v284
    %v1054 = vunpack.c.l.b16 %v285
    %v1055 = vunpack.c.h.b16 %v285
    %v1056 = vunpack.c.l.b16 %v286
    %v1057 = vunpack.c.h.b16 %v286
    %v1058 = vunpack.c.l.b16 %v287
    %v1059 = vunpack.c.h.b16 %v287
    %v1060 = vunpack.c.l.b16 %v288
    %v1061 = vunpack.c.h.b16 %v288
    %v1062 = vunpack.c.l.b16 %v289
    %v1063 = vunpack.c.h.b16 %v289
    %v1064 = vunpack.c.l.b16 %v290
    %v1065 = vunpack.c.h.b16 %v290
    %v1066 = vunpack.c.l.b16 %v291
    %v1067 = vunpack.c.h.b16 %v291
    %v1068 = vunpack.c.l.b16 %v292
    %v1069 = vunpack.c.h.b16 %v292
    %v1070 = vunpack.c.l.b16 %v293
    %v1071 = vunpack.c.h.b16 %v293
    %v1072 = vunpack.c.l.b16 %v294
    %v1073 = vunpack.c.h.b16 %v294
    %v1074 = vunpack.c.l.b16 %v295
    %v1075 = vunpack.c.h.b16 %v295
    %v1076 = vunpack.c.l.b16 %v296
    %v1077 = vunpack.c.h.b16 %v296
    %v1078 = vunpack.c.l.b16 %v297
    %v1079 = vunpack.c.h.b16 %v297
    %v1080 = vunpack.c.l.b16 %v298
    %v1081 = vunpack.c.h.b16 %v298
    %v1082 = vunpack.c.l.b16 %v299
    %v1083 = vunpack.c.h.b16 %v299
    %v1084 = vunpack.c.l.b16 %v300
    %v1085 = vunpack.c.h.b16 %v300
    %v1086 = vunpack.c.l.b16 %v301
    %v1087 = vunpack.c.h.b16 %v301
    %v1088 = vunpack.c.l.b16 %v302
    %v1089 = vunpack.c.h.b16 %v302
    %v1090 = vunpack.c.l.b16 %v303
    %v1091 = vunpack.c.h.b16 %v303
    %v1092 = vunpack.c.l.b16 %v304
    %v1093 = vunpack.c.h.b16 %v304
    %v1094 = vunpack.c.l.b16 %v305
    %v1095 = vunpack.c.h.b16 %v305
    %v1096 = vunpack.c.l.b16 %v306
    %v1097 = vunpack.c.h.b16 %v306
    %v1098 = vunpack.c.l.b16 %v307
    %v1099 = vunpack.c.h.b16 %v307
    %v1100 = vunpack.c.l.b16 %v308
    %v1101 = vunpack.c.h.b16 %v308
    %v1102 = vunpack.c.l.b16 %v309
    %v1103 = vunpack.c.h.b16 %v309
    %v1104 = vunpack.c.l.b16 %v310
    %v1105 = vunpack.c.h.b16 %v310
    %v1106 = vunpack.c.l.b16 %v311
    %v1107 = vunpack.c.h.b16 %v311
    %v1108 = vunpack.c.l.b16 %v312
    %v1109 = vunpack.c.h.b16 %v312
    %v1110 = vunpack.c.l.b16 %v313
    %v1111 = vunpack.c.h.b16 %v313
    %v1112 = vunpack.c.l.b16 %v314
    %v1113 = vunpack.c.h.b16 %v314
    %v1114 = vunpack.c.l.b16 %v315
    %v1115 = vunpack.c.h.b16 %v315
    %v1116 = vunpack.c.l.b16 %v316
    %v1117 = vunpack.c.h.b16 %v316
    %v1118 = vunpack.c.l.b16 %v317
    %v1119 = vunpack.c.h.b16 %v317
    %v1120 = vunpack.c.l.b16 %v318
    %v1121 = vunpack.c.h.b16 %v318
    %v1122 = vunpack.c.l.b16 %v319
    %v1123 = vunpack.c.h.b16 %v319
    %v1124 = vunpack.c.l.b16 %v320
    %v1125 = vunpack.c.h.b16 %v320
    %v1126 = vunpack.c.l.b16 %v321
    %v1127 = vunpack.c.h.b16 %v321
    %v1128 = vunpack.c.l.b16 %v322
    %v1129 = vunpack.c.h.b16 %v322
    %v1130 = vunpack.c.l.b16 %v323
    %v1131 = vunpack.c.h.b16 %v323
    %v1132 = vunpack.c.l.b16 %v324
    %v1133 = vunpack.c.h.b16 %v324
    %v1134 = vunpack.c.l.b16 %v325
    %v1135 = vunpack.c.h.b16 %v325
    %v1136 = vpack.c.b16 %v632, %v624
    %v1137 = vpack.c.b16 %v633, %v625
    %v1138 = vpack.c.b16 %v634, %v626
    %v1139 = vpack.c.b16 %v635, %v627
    %v1140 = vpack.c.b16 %v636, %v628
    %v1141 = vpack.c.b16 %v637, %v629
    %v1142 = vpack.c.b16 %v638, %v630
    %v1143 = vpack.c.b16 %v639, %v631
    %v1144 = vpack.c.b16 %v648, %v640
    %v1145 = vpack.c.b16 %v649, %v641
    %v1146 = vpack.c.b16 %v650, %v642
    %v1147 = vpack.c.b16 %v651, %v643
    %v1148 = vpack.c.b16 %v652, %v644
    %v1149 = vpack.c.b16 %v653, %v645
    %v1150 = vpack.c.b16 %v654, %v646
    %v1151 = vpack.c.b16 %v655, %v647
    %v1152 = vpack.c.b16 %v664, %v656
    %v1153 = vpack.c.b16 %v665, %v657
    %v1154 = vpack.c.b16 %v666, %v658
    %v1155 = vpack.c.b16 %v667, %v659
    %v1156 = vpack.c.b16 %v668, %v660
    %v1157 = vpack.c.b16 %v669, %v661
    %v1158 = vpack.c.b16 %v670, %v662
    %v1159 = vpack.c.b16 %v671, %v663
    %v1160 = vpack.c.b16 %v680, %v672
    %v1161 = vpack.c.b16 %v681, %v673
    %v1162 = vpack.c.b16 %v682, %v674
    %v1163 = vpack.c.b16 %v683, %v675
    %v1164 = vpack.c.b16 %v684, %v676
    %v1165 = vpack.c.b16 %v685, %v677
    %v1166 = vpack.c.b16 %v686, %v678
    %v1167 = vpack.c.b16 %v687, %v679
    %v1168 = vpack.c.b16 %v696, %v688
    %v1169 = vpack.c.b16 %v697, %v689
    %v1170 = vpack.c.b16 %v698, %v690
    %v1171 = vpack.c.b16 %v699, %v691
    %v1172 = vpack.c.b16 %v700, %v692
    %v1173 = vpack.c.b16 %v701, %v693
    %v1174 = vpack.c.b16 %v702, %v694
    %v1175 = vpack.c.b16 %v703, %v695
    %v1176 = vpack.c.b16 %v712, %v704
    %v1177 = vpack.c.b16 %v713, %v705
    %v1178 = vpack.c.b16 %v714, %v706
    %v1179 = vpack.c.b16 %v715, %v707
    %v1180 = vpack.c.b16 %v716, %v708
    %v1181 = vpack.c.b16 %v717, %v709
    %v1182 = vpack.c.b16 %v718, %v710
    %v1183 = vpack.c.b16 %v719, %v711
    %v1184 = vpack.c.b16 %v728, %v720
    %v1185 = vpack.c.b16 %v729, %v721
    %v1186 = vpack.c.b16 %v730, %v722
    %v1187 = vpack.c.b16 %v731, %v723
    %v1188 = vpack.c.b16 %v732, %v724
    %v1189 = vpack.c.b16 %v733, %v725
    %v1190 = vpack.c.b16 %v734, %v726
    %v1191 = vpack.c.b16 %v735, %v727
    %v1192 = vpack.c.b16 %v744, %v736
    %v1193 = vpack.c.b16 %v745, %v737
    %v1194 = vpack.c.b16 %v746, %v738
    %v1195 = vpack.c.b16 %v747, %v739
    %v1196 = vpack.c.b16 %v748, %v740
    %v1197 = vpack.c.b16 %v749, %v741
    %v1198 = vpack.c.b16 %v750, %v742
    %v1199 = vpack.c.b16 %v751, %v743
    %v1200 = vpack.c.b16 %v760, %v752
    %v1201 = vpack.c.b16 %v761, %v753
    %v1202 = vpack.c.b16 %v762, %v754
    %v1203 = vpack.c.b16 %v763, %v755
    %v1204 = vpack.c.b16 %v764, %v756
    %v1205 = vpack.c.b16 %v765, %v757
    %v1206 = vpack.c.b16 %v766, %v758
    %v1207 = vpack.c.b16 %v767, %v759
    %v1208 = vpack.c.b16 %v776, %v768
    %v1209 = vpack.c.b16 %v777, %v769
    %v1210 = vpack.c.b16 %v778, %v770
    %v1211 = vpack.c.b16 %v779, %v771
    %v1212 = vpack.c.b16 %v780, %v772
    %v1213 = vpack.c.b16 %v781, %v773
    %v1214 = vpack.c.b16 %v782, %v774
    %v1215 = vpack.c.b16 %v783, %v775
    %v1216 = vpack.c.b16 %v792, %v784
    %v1217 = vpack.c.b16 %v793, %v785
    %v1218 = vpack.c.b16 %v794, %v786
    %v1219 = vpack.c.b16 %v795, %v787
    %v1220 = vpack.c.b16 %v796, %v788
    %v1221 = vpack.c.b16 %v797, %v789
    %v1222 = vpack.c.b16 %v798, %v790
    %v1223 = vpack.c.b16 %v799, %v791
    %v1224 = vpack.c.b16 %v808, %v800
    %v1225 = vpack.c.b16 %v809, %v801
    %v1226 = vpack.c.b16 %v810, %v802
    %v1227 = vpack.c.b16 %v811, %v803
    %v1228 = vpack.c.b16 %v812, %v804
    %v1229 = vpack.c.b16 %v813, %v805
    %v1230 = vpack.c.b16 %v814, %v806
    %v1231 = vpack.c.b16 %v815, %v807
    %v1232 = vpack.c.b16 %v824, %v816
    %v1233 = vpack.c.b16 %v825, %v817
    %v1234 = vpack.c.b16 %v826, %v818
    %v1235 = vpack.c.b16 %v827, %v819
    %v1236 = vpack.c.b16 %v828, %v820
    %v1237 = vpack.c.b16 %v829, %v821
    %v1238 = vpack.c.b16 %v830, %v822
    %v1239 = vpack.c.b16 %v831, %v823
    %v1240 = vpack.c.b16 %v840, %v832
    %v1241 = vpack.c.b16 %v841, %v833
    %v1242 = vpack.c.b16 %v842, %v834
    %v1243 = vpack.c.b16 %v843, %v835
    %v1244 = vpack.c.b16 %v844, %v836
    %v1245 = vpack.c.b16 %v845, %v837
    %v1246 = vpack.c.b16 %v846, %v838
    %v1247 = vpack.c.b16 %v847, %v839
    %v1248 = vpack.c.b16 %v856, %v848
    %v1249 = vpack.c.b16 %v857, %v849
    %v1250 = vpack.c.b16 %v858, %v850
    %v1251 = vpack.c.b16 %v859, %v851
    %v1252 = vpack.c.b16 %v860, %v852
    %v1253 = vpack.c.b16 %v861, %v853
    %v1254 = vpack.c.b16 %v862, %v854
    %v1255 = vpack.c.b16 %v863, %v855
    %v1256 = vpack.c.b16 %v872, %v864
    %v1257 = vpack.c.b16 %v873, %v865
    %v1258 = vpack.c.b16 %v874, %v866
    %v1259 = vpack.c.b16 %v875, %v867
    %v1260 = vpack.c.b16 %v876, %v868
    %v1261 = vpack.c.b16 %v877, %v869
    %v1262 = vpack.c.b16 %v878, %v870
    %v1263 = vpack.c.b16 %v879, %v871
    %v1264 = vpack.c.b16 %v888, %v880
    %v1265 = vpack.c.b16 %v889, %v881
    %v1266 = vpack.c.b16 %v890, %v882
    %v1267 = vpack.c.b16 %v891, %v883
    %v1268 = vpack.c.b16 %v892, %v884
    %v1269 = vpack.c.b16 %v893, %v885
    %v1270 = vpack.c.b16 %v894, %v886
    %v1271 = vpack.c.b16 %v895, %v887
    %v1272 = vpack.c.b16 %v904, %v896
    %v1273 = vpack.c.b16 %v905, %v897
    %v1274 = vpack.c.b16 %v906, %v898
    %v1275 = vpack.c.b16 %v907, %v899
    %v1276 = vpack.c.b16 %v908, %v900
    %v1277 = vpack.c.b16 %v909, %v901
    %v1278 = vpack.c.b16 %v910, %v902
    %v1279 = vpack.c.b16 %v911, %v903
    %v1280 = vpack.c.b16 %v920, %v912
    %v1281 = vpack.c.b16 %v921, %v913
    %v1282 = vpack.c.b16 %v922, %v914
    %v1283 = vpack.c.b16 %v923, %v915
    %v1284 = vpack.c.b16 %v924, %v916
    %v1285 = vpack.c.b16 %v925, %v917
    %v1286 = vpack.c.b16 %v926, %v918
    %v1287 = vpack.c.b16 %v927, %v919
    %v1288 = vpack.c.b16 %v936, %v928
    %v1289 = vpack.c.b16 %v937, %v929
    %v1290 = vpack.c.b16 %v938, %v930
    %v1291 = vpack.c.b16 %v939, %v931
    %v1292 = vpack.c.b16 %v940, %v932
    %v1293 = vpack.c.b16 %v941, %v933
    %v1294 = vpack.c.b16 %v942, %v934
    %v1295 = vpack.c.b16 %v943, %v935
    %v1296 = vpack.c.b16 %v952, %v944
    %v1297 = vpack.c.b16 %v953, %v945
    %v1298 = vpack.c.b16 %v954, %v946
    %v1299 = vpack.c.b16 %v955, %v947
    %v1300 = vpack.c.b16 %v956, %v948
    %v1301 = vpack.c.b16 %v957, %v949
    %v1302 = vpack.c.b16 %v958, %v950
    %v1303 = vpack.c.b16 %v959, %v951
    %v1304 = vpack.c.b16 %v968, %v960
    %v1305 = vpack.c.b16 %v969, %v961
    %v1306 = vpack.c.b16 %v970, %v962
    %v1307 = vpack.c.b16 %v971, %v963
    %v1308 = vpack.c.b16 %v972, %v964
    %v1309 = vpack.c.b16 %v973, %v965
    %v1310 = vpack.c.b16 %v974, %v966
    %v1311 = vpack.c.b16 %v975, %v967
    %v1312 = vpack.c.b16 %v984, %v976
    %v1313 = vpack.c.b16 %v985, %v977
    %v1314 = vpack.c.b16 %v986, %v978
    %v1315 = vpack.c.b16 %v987, %v979
    %v1316 = vpack.c.b16 %v988, %v980
    %v1317 = vpack.c.b16 %v989, %v981
    %v1318 = vpack.c.b16 %v990, %v982
    %v1319 = vpack.c.b16 %v991, %v983
    %v1320 = vpack.c.b16 %v1000, %v992
    %v1321 = vpack.c.b16 %v1001, %v993
    %v1322 = vpack.c.b16 %v1002, %v994
    %v1323 = vpack.c.b16 %v1003, %v995
    %v1324 = vpack.c.b16 %v1004, %v996
    %v1325 = vpack.c.b16 %v1005, %v997
    %v1326 = vpack.c.b16 %v1006, %v998
    %v1327 = vpack.c.b16 %v1007, %v999
    %v1328 = vpack.c.b16 %v1016, %v1008
    %v1329 = vpack.c.b16 %v1017, %v1009
    %v1330 = vpack.c.b16 %v1018, %v1010
    %v1331 = vpack.c.b16 %v1019, %v1011
    %v1332 = vpack.c.b16 %v1020, %v1012
    %v1333 = vpack.c.b16 %v1021, %v1013
    %v1334 = vpack.c.b16 %v1022, %v1014
    %v1335 = vpack.c.b16 %v1023, %v1015
    %v1336 = vpack.c.b16 %v1032, %v1024
    %v1337 = vpack.c.b16 %v1033, %v1025
    %v1338 = vpack.c.b16 %v1034, %v1026
    %v1339 = vpack.c.b16 %v1035, %v1027
    %v1340 = vpack.c.b16 %v1036, %v1028
    %v1341 = vpack.c.b16 %v1037, %v1029
    %v1342 = vpack.c.b16 %v1038, %v1030
    %v1343 = vpack.c.b16 %v1039, %v1031
    %v1344 = vpack.c.b16 %v1048, %v1040
    %v1345 = vpack.c.b16 %v1049, %v1041
    %v1346 = vpack.c.b16 %v1050, %v1042
    %v1347 = vpack.c.b16 %v1051, %v1043
    %v1348 = vpack.c.b16 %v1052, %v1044
    %v1349 = vpack.c.b16 %v1053, %v1045
    %v1350 = vpack.c.b16 %v1054, %v1046
    %v1351 = vpack.c.b16 %v1055, %v1047
    %v1352 = vpack.c.b16 %v1064, %v1056
    %v1353 = vpack.c.b16 %v1065, %v1057
    %v1354 = vpack.c.b16 %v1066, %v1058
    %v1355 = vpack.c.b16 %v1067, %v1059
    %v1356 = vpack.c.b16 %v1068, %v1060
    %v1357 = vpack.c.b16 %v1069, %v1061
    %v1358 = vpack.c.b16 %v1070, %v1062
    %v1359 = vpack.c.b16 %v1071, %v1063
    %v1360 = vpack.c.b16 %v1080, %v1072
    %v1361 = vpack.c.b16 %v1081, %v1073
    %v1362 = vpack.c.b16 %v1082, %v1074
    %v1363 = vpack.c.b16 %v1083, %v1075
    %v1364 = vpack.c.b16 %v1084, %v1076
    %v1365 = vpack.c.b16 %v1085, %v1077
    %v1366 = vpack.c.b16 %v1086, %v1078
    %v1367 = vpack.c.b16 %v1087, %v1079
    %v1368 = vpack.c.b16 %v1096, %v1088
    %v1369 = vpack.c.b16 %v1097, %v1089
    %v1370 = vpack.c.b16 %v1098, %v1090
    %v1371 = vpack.c.b16 %v1099, %v1091
    %v1372 = vpack.c.b16 %v1100, %v1092
    %v1373 = vpack.c.b16 %v1101, %v1093
    %v1374 = vpack.c.b16 %v1102, %v1094
    %v1375 = vpack.c.b16 %v1103, %v1095
    %v1376 = vpack.c.b16 %v1112, %v1104
    %v1377 = vpack.c.b16 %v1113, %v1105
    %v1378 = vpack.c.b16 %v1114, %v1106
    %v1379 = vpack.c.b16 %v1115, %v1107
    %v1380 = vpack.c.b16 %v1116, %v1108
    %v1381 = vpack.c.b16 %v1117, %v1109
    %v1382 = vpack.c.b16 %v1118, %v1110
    %v1383 = vpack.c.b16 %v1119, %v1111
    %v1384 = vpack.c.b16 %v1128, %v1120
    %v1385 = vpack.c.b16 %v1129, %v1121
    %v1386 = vpack.c.b16 %v1130, %v1122
    %v1387 = vpack.c.b16 %v1131, %v1123
    %v1388 = vpack.c.b16 %v1132, %v1124
    %v1389 = vpack.c.b16 %v1133, %v1125
    %v1390 = vpack.c.b16 %v1134, %v1126
    %v1391 = vpack.c.b16 %v1135, %v1127
    %1648 = vmatprep.subr.bf16.mxu0 %v1193
    %1649 = vmatpush1.bf16.msra.mxu0 %v1192
    %1650 = vmatprep.subr.bf16.mxu0 %v1185
    %1651 = vmatpush1.bf16.msra.mxu0 %v1184
    %1652 = vmatprep.subr.bf16.mxu0 %v1177
    %1653 = vmatpush1.bf16.msra.mxu0 %v1176
    %1654 = vmatprep.subr.bf16.mxu0 %v1169
    %1655 = vmatpush1.bf16.msra.mxu0 %v1168
    %1656 = vmatprep.subr.bf16.mxu0 %v1161
    %1657 = vmatpush1.bf16.msra.mxu0 %v1160
    %1658 = vmatprep.subr.bf16.mxu0 %v1153
    %1659 = vmatpush1.bf16.msra.mxu0 %v1152
    %1660 = vmatprep.subr.bf16.mxu0 %v1145
    %1661 = vmatpush1.bf16.msra.mxu0 %v1144
    %1662 = vmatprep.subr.bf16.mxu0 %v1137
    %1663 = vmatpush1.bf16.msra.mxu0 %v1136
    %1664 = vmatprep.subr.bf16.mxu0 %v1257
    %1665 = vmatpush2.bf16.msra.mxu0 %v1256
    %1666 = vmatprep.subr.bf16.mxu0 %v1249
    %1667 = vmatpush2.bf16.msra.mxu0 %v1248
    %1668 = vmatprep.subr.bf16.mxu0 %v1241
    %1669 = vmatpush2.bf16.msra.mxu0 %v1240
    %1670 = vmatprep.subr.bf16.mxu0 %v1233
    %1671 = vmatpush2.bf16.msra.mxu0 %v1232
    %1672 = vmatprep.subr.bf16.mxu0 %v1225
    %1673 = vmatpush2.bf16.msra.mxu0 %v1224
    %1674 = vmatprep.subr.bf16.mxu0 %v1217
    %1675 = vmatpush2.bf16.msra.mxu0 %v1216
    %1676 = vmatprep.subr.bf16.mxu0 %v1209
    %1677 = vmatpush2.bf16.msra.mxu0 %v1208
    %1678 = vmatprep.subr.bf16.mxu0 %v1201
    %1679 = vmatpush2.bf16.msra.mxu0 %v1200
    %1680 = vmatprep.mubr.bf16.mxu0 %v67
    %1681 = vmatmul.mubr.bf16.gmra.mxu0 %v66
    %v1682 = vpop.f32.mrf.mxu0
    %v1683 = vadd.f32 %v331, %v1682
    %v1684 = vpop.f32.mrf.mxu0
    %v1685 = vadd.f32 %v335, %v1684
    %v1686 = vpop.f32.mrf.mxu0
    %v1687 = vpop.f32.mrf.mxu0
    %1688 = vdwg.mxu0
    %1689 = vmatprep.subr.bf16.mxu0 %v1321
    %1690 = vmatpush1.bf16.msra.mxu0 %v1320
    %1691 = vmatprep.subr.bf16.mxu0 %v1313
    %1692 = vmatpush1.bf16.msra.mxu0 %v1312
    %1693 = vmatprep.subr.bf16.mxu0 %v1305
    %1694 = vmatpush1.bf16.msra.mxu0 %v1304
    %1695 = vmatprep.subr.bf16.mxu0 %v1297
    %1696 = vmatpush1.bf16.msra.mxu0 %v1296
    %1697 = vmatprep.subr.bf16.mxu0 %v1289
    %1698 = vmatpush1.bf16.msra.mxu0 %v1288
    %1699 = vmatprep.subr.bf16.mxu0 %v1281
    %1700 = vmatpush1.bf16.msra.mxu0 %v1280
    %1701 = vmatprep.subr.bf16.mxu0 %v1273
    %1702 = vmatpush1.bf16.msra.mxu0 %v1272
    %1703 = vmatprep.subr.bf16.mxu0 %v1265
    %1704 = vmatpush1.bf16.msra.mxu0 %v1264
    %1705 = vmatprep.subr.bf16.mxu0 %v1385
    %1706 = vmatpush2.bf16.msra.mxu0 %v1384
    %1707 = vmatprep.subr.bf16.mxu0 %v1377
    %1708 = vmatpush2.bf16.msra.mxu0 %v1376
    %1709 = vmatprep.subr.bf16.mxu0 %v1369
    %1710 = vmatpush2.bf16.msra.mxu0 %v1368
    %1711 = vmatprep.subr.bf16.mxu0 %v1361
    %1712 = vmatpush2.bf16.msra.mxu0 %v1360
    %1713 = vmatprep.subr.bf16.mxu0 %v1353
    %1714 = vmatpush2.bf16.msra.mxu0 %v1352
    %1715 = vmatprep.subr.bf16.mxu0 %v1345
    %1716 = vmatpush2.bf16.msra.mxu0 %v1344
    %1717 = vmatprep.subr.bf16.mxu0 %v1337
    %1718 = vmatpush2.bf16.msra.mxu0 %v1336
    %1719 = vmatprep.subr.bf16.mxu0 %v1329
    %1720 = vmatpush2.bf16.msra.mxu0 %v1328
    %1721 = vmatprep.mubr.bf16.mxu0 %v69
    %1722 = vmatmul.mubr.bf16.gmra.mxu0 %v68
    %v1723 = vpop.f32.mrf.mxu0
    %v1724 = vadd.f32 %v1683, %v1723
    %v1725 = vpop.f32.mrf.mxu0
    %v1726 = vadd.f32 %v1685, %v1725
    %v1727 = vpop.f32.mrf.mxu0
    %v1728 = vpop.f32.mrf.mxu0
    %1729 = vdwg.mxu0
    %1730 = vmatprep.subr.bf16.mxu0 %v1195
    %1731 = vmatpush1.bf16.msra.mxu0 %v1194
    %1732 = vmatprep.subr.bf16.mxu0 %v1187
    %1733 = vmatpush1.bf16.msra.mxu0 %v1186
    %1734 = vmatprep.subr.bf16.mxu0 %v1179
    %1735 = vmatpush1.bf16.msra.mxu0 %v1178
    %1736 = vmatprep.subr.bf16.mxu0 %v1171
    %1737 = vmatpush1.bf16.msra.mxu0 %v1170
    %1738 = vmatprep.subr.bf16.mxu0 %v1163
    %1739 = vmatpush1.bf16.msra.mxu0 %v1162
    %1740 = vmatprep.subr.bf16.mxu0 %v1155
    %1741 = vmatpush1.bf16.msra.mxu0 %v1154
    %1742 = vmatprep.subr.bf16.mxu0 %v1147
    %1743 = vmatpush1.bf16.msra.mxu0 %v1146
    %1744 = vmatprep.subr.bf16.mxu0 %v1139
    %1745 = vmatpush1.bf16.msra.mxu0 %v1138
    %1746 = vmatprep.subr.bf16.mxu0 %v1259
    %1747 = vmatpush2.bf16.msra.mxu0 %v1258
    %1748 = vmatprep.subr.bf16.mxu0 %v1251
    %1749 = vmatpush2.bf16.msra.mxu0 %v1250
    %1750 = vmatprep.subr.bf16.mxu0 %v1243
    %1751 = vmatpush2.bf16.msra.mxu0 %v1242
    %1752 = vmatprep.subr.bf16.mxu0 %v1235
    %1753 = vmatpush2.bf16.msra.mxu0 %v1234
    %1754 = vmatprep.subr.bf16.mxu0 %v1227
    %1755 = vmatpush2.bf16.msra.mxu0 %v1226
    %1756 = vmatprep.subr.bf16.mxu0 %v1219
    %1757 = vmatpush2.bf16.msra.mxu0 %v1218
    %1758 = vmatprep.subr.bf16.mxu0 %v1211
    %1759 = vmatpush2.bf16.msra.mxu0 %v1210
    %1760 = vmatprep.subr.bf16.mxu0 %v1203
    %1761 = vmatpush2.bf16.msra.mxu0 %v1202
    %1762 = vmatprep.mubr.bf16.mxu0 %v67
    %1763 = vmatmul.mubr.bf16.gmra.mxu0 %v66
    %v1764 = vpop.f32.mrf.mxu0
    %v1765 = vadd.f32 %v339, %v1764
    %v1766 = vpop.f32.mrf.mxu0
    %v1767 = vadd.f32 %v343, %v1766
    %v1768 = vpop.f32.mrf.mxu0
    %v1769 = vpop.f32.mrf.mxu0
    %1770 = vdwg.mxu0
    %1771 = vmatprep.subr.bf16.mxu0 %v1323
    %1772 = vmatpush1.bf16.msra.mxu0 %v1322
    %1773 = vmatprep.subr.bf16.mxu0 %v1315
    %1774 = vmatpush1.bf16.msra.mxu0 %v1314
    %1775 = vmatprep.subr.bf16.mxu0 %v1307
    %1776 = vmatpush1.bf16.msra.mxu0 %v1306
    %1777 = vmatprep.subr.bf16.mxu0 %v1299
    %1778 = vmatpush1.bf16.msra.mxu0 %v1298
    %1779 = vmatprep.subr.bf16.mxu0 %v1291
    %1780 = vmatpush1.bf16.msra.mxu0 %v1290
    %1781 = vmatprep.subr.bf16.mxu0 %v1283
    %1782 = vmatpush1.bf16.msra.mxu0 %v1282
    %1783 = vmatprep.subr.bf16.mxu0 %v1275
    %1784 = vmatpush1.bf16.msra.mxu0 %v1274
    %1785 = vmatprep.subr.bf16.mxu0 %v1267
    %1786 = vmatpush1.bf16.msra.mxu0 %v1266
    %1787 = vmatprep.subr.bf16.mxu0 %v1387
    %1788 = vmatpush2.bf16.msra.mxu0 %v1386
    %1789 = vmatprep.subr.bf16.mxu0 %v1379
    %1790 = vmatpush2.bf16.msra.mxu0 %v1378
    %1791 = vmatprep.subr.bf16.mxu0 %v1371
    %1792 = vmatpush2.bf16.msra.mxu0 %v1370
    %1793 = vmatprep.subr.bf16.mxu0 %v1363
    %1794 = vmatpush2.bf16.msra.mxu0 %v1362
    %1795 = vmatprep.subr.bf16.mxu0 %v1355
    %1796 = vmatpush2.bf16.msra.mxu0 %v1354
    %1797 = vmatprep.subr.bf16.mxu0 %v1347
    %1798 = vmatpush2.bf16.msra.mxu0 %v1346
    %1799 = vmatprep.subr.bf16.mxu0 %v1339
    %1800 = vmatpush2.bf16.msra.mxu0 %v1338
    %1801 = vmatprep.subr.bf16.mxu0 %v1331
    %1802 = vmatpush2.bf16.msra.mxu0 %v1330
    %1803 = vmatprep.mubr.bf16.mxu0 %v69
    %1804 = vmatmul.mubr.bf16.gmra.mxu0 %v68
    %v1805 = vpop.f32.mrf.mxu0
    %v1806 = vadd.f32 %v1765, %v1805
    %v1807 = vpop.f32.mrf.mxu0
    %v1808 = vadd.f32 %v1767, %v1807
    %v1809 = vpop.f32.mrf.mxu0
    %v1810 = vpop.f32.mrf.mxu0
    %1811 = vdwg.mxu0
    %1812 = vmatprep.subr.bf16.mxu0 %v1197
    %1813 = vmatpush1.bf16.msra.mxu0 %v1196
    %1814 = vmatprep.subr.bf16.mxu0 %v1189
    %1815 = vmatpush1.bf16.msra.mxu0 %v1188
    %1816 = vmatprep.subr.bf16.mxu0 %v1181
    %1817 = vmatpush1.bf16.msra.mxu0 %v1180
    %1818 = vmatprep.subr.bf16.mxu0 %v1173
    %1819 = vmatpush1.bf16.msra.mxu0 %v1172
    %1820 = vmatprep.subr.bf16.mxu0 %v1165
    %1821 = vmatpush1.bf16.msra.mxu0 %v1164
    %1822 = vmatprep.subr.bf16.mxu0 %v1157
    %1823 = vmatpush1.bf16.msra.mxu0 %v1156
    %1824 = vmatprep.subr.bf16.mxu0 %v1149
    %1825 = vmatpush1.bf16.msra.mxu0 %v1148
    %1826 = vmatprep.subr.bf16.mxu0 %v1141
    %1827 = vmatpush1.bf16.msra.mxu0 %v1140
    %1828 = vmatprep.subr.bf16.mxu0 %v1261
    %1829 = vmatpush2.bf16.msra.mxu0 %v1260
    %1830 = vmatprep.subr.bf16.mxu0 %v1253
    %1831 = vmatpush2.bf16.msra.mxu0 %v1252
    %1832 = vmatprep.subr.bf16.mxu0 %v1245
    %1833 = vmatpush2.bf16.msra.mxu0 %v1244
    %1834 = vmatprep.subr.bf16.mxu0 %v1237
    %1835 = vmatpush2.bf16.msra.mxu0 %v1236
    %1836 = vmatprep.subr.bf16.mxu0 %v1229
    %1837 = vmatpush2.bf16.msra.mxu0 %v1228
    %1838 = vmatprep.subr.bf16.mxu0 %v1221
    %1839 = vmatpush2.bf16.msra.mxu0 %v1220
    %1840 = vmatprep.subr.bf16.mxu0 %v1213
    %1841 = vmatpush2.bf16.msra.mxu0 %v1212
    %1842 = vmatprep.subr.bf16.mxu0 %v1205
    %1843 = vmatpush2.bf16.msra.mxu0 %v1204
    %1844 = vmatprep.mubr.bf16.mxu0 %v67
    %1845 = vmatmul.mubr.bf16.gmra.mxu0 %v66
    %v1846 = vpop.f32.mrf.mxu0
    %v1847 = vadd.f32 %v347, %v1846
    %v1848 = vpop.f32.mrf.mxu0
    %v1849 = vadd.f32 %v351, %v1848
    %v1850 = vpop.f32.mrf.mxu0
    %v1851 = vpop.f32.mrf.mxu0
    %1852 = vdwg.mxu0
    %1853 = vmatprep.subr.bf16.mxu0 %v1325
    %1854 = vmatpush1.bf16.msra.mxu0 %v1324
    %1855 = vmatprep.subr.bf16.mxu0 %v1317
    %1856 = vmatpush1.bf16.msra.mxu0 %v1316
    %1857 = vmatprep.subr.bf16.mxu0 %v1309
    %1858 = vmatpush1.bf16.msra.mxu0 %v1308
    %1859 = vmatprep.subr.bf16.mxu0 %v1301
    %1860 = vmatpush1.bf16.msra.mxu0 %v1300
    %1861 = vmatprep.subr.bf16.mxu0 %v1293
    %1862 = vmatpush1.bf16.msra.mxu0 %v1292
    %1863 = vmatprep.subr.bf16.mxu0 %v1285
    %1864 = vmatpush1.bf16.msra.mxu0 %v1284
    %1865 = vmatprep.subr.bf16.mxu0 %v1277
    %1866 = vmatpush1.bf16.msra.mxu0 %v1276
    %1867 = vmatprep.subr.bf16.mxu0 %v1269
    %1868 = vmatpush1.bf16.msra.mxu0 %v1268
    %1869 = vmatprep.subr.bf16.mxu0 %v1389
    %1870 = vmatpush2.bf16.msra.mxu0 %v1388
    %1871 = vmatprep.subr.bf16.mxu0 %v1381
    %1872 = vmatpush2.bf16.msra.mxu0 %v1380
    %1873 = vmatprep.subr.bf16.mxu0 %v1373
    %1874 = vmatpush2.bf16.msra.mxu0 %v1372
    %1875 = vmatprep.subr.bf16.mxu0 %v1365
    %1876 = vmatpush2.bf16.msra.mxu0 %v1364
    %1877 = vmatprep.subr.bf16.mxu0 %v1357
    %1878 = vmatpush2.bf16.msra.mxu0 %v1356
    %1879 = vmatprep.subr.bf16.mxu0 %v1349
    %1880 = vmatpush2.bf16.msra.mxu0 %v1348
    %1881 = vmatprep.subr.bf16.mxu0 %v1341
    %1882 = vmatpush2.bf16.msra.mxu0 %v1340
    %1883 = vmatprep.subr.bf16.mxu0 %v1333
    %1884 = vmatpush2.bf16.msra.mxu0 %v1332
    %1885 = vmatprep.mubr.bf16.mxu0 %v69
    %1886 = vmatmul.mubr.bf16.gmra.mxu0 %v68
    %v1887 = vpop.f32.mrf.mxu0
    %v1888 = vadd.f32 %v1847, %v1887
    %v1889 = vpop.f32.mrf.mxu0
    %v1890 = vadd.f32 %v1849, %v1889
    %v1891 = vpop.f32.mrf.mxu0
    %v1892 = vpop.f32.mrf.mxu0
    %1893 = vdwg.mxu0
    %1894 = vmatprep.subr.bf16.mxu0 %v1199
    %1895 = vmatpush1.bf16.msra.mxu0 %v1198
    %1896 = vmatprep.subr.bf16.mxu0 %v1191
    %1897 = vmatpush1.bf16.msra.mxu0 %v1190
    %1898 = vmatprep.subr.bf16.mxu0 %v1183
    %1899 = vmatpush1.bf16.msra.mxu0 %v1182
    %1900 = vmatprep.subr.bf16.mxu0 %v1175
    %1901 = vmatpush1.bf16.msra.mxu0 %v1174
    %1902 = vmatprep.subr.bf16.mxu0 %v1167
    %1903 = vmatpush1.bf16.msra.mxu0 %v1166
    %1904 = vmatprep.subr.bf16.mxu0 %v1159
    %1905 = vmatpush1.bf16.msra.mxu0 %v1158
    %1906 = vmatprep.subr.bf16.mxu0 %v1151
    %1907 = vmatpush1.bf16.msra.mxu0 %v1150
    %1908 = vmatprep.subr.bf16.mxu0 %v1143
    %1909 = vmatpush1.bf16.msra.mxu0 %v1142
    %1910 = vmatprep.subr.bf16.mxu0 %v1263
    %1911 = vmatpush2.bf16.msra.mxu0 %v1262
    %1912 = vmatprep.subr.bf16.mxu0 %v1255
    %1913 = vmatpush2.bf16.msra.mxu0 %v1254
    %1914 = vmatprep.subr.bf16.mxu0 %v1247
    %1915 = vmatpush2.bf16.msra.mxu0 %v1246
    %1916 = vmatprep.subr.bf16.mxu0 %v1239
    %1917 = vmatpush2.bf16.msra.mxu0 %v1238
    %1918 = vmatprep.subr.bf16.mxu0 %v1231
    %1919 = vmatpush2.bf16.msra.mxu0 %v1230
    %1920 = vmatprep.subr.bf16.mxu0 %v1223
    %1921 = vmatpush2.bf16.msra.mxu0 %v1222
    %1922 = vmatprep.subr.bf16.mxu0 %v1215
    %1923 = vmatpush2.bf16.msra.mxu0 %v1214
    %1924 = vmatprep.subr.bf16.mxu0 %v1207
    %1925 = vmatpush2.bf16.msra.mxu0 %v1206
    %1926 = vmatprep.mubr.bf16.mxu0 %v67
    %1927 = vmatmul.mubr.bf16.gmra.mxu0 %v66
    %v1928 = vpop.f32.mrf.mxu0
    %v1929 = vadd.f32 %v355, %v1928
    %v1930 = vpop.f32.mrf.mxu0
    %v1931 = vadd.f32 %v359, %v1930
    %v1932 = vpop.f32.mrf.mxu0
    %v1933 = vpop.f32.mrf.mxu0
    %1934 = vdwg.mxu0
    %1935 = vmatprep.subr.bf16.mxu0 %v1327
    %1936 = vmatpush1.bf16.msra.mxu0 %v1326
    %1937 = vmatprep.subr.bf16.mxu0 %v1319
    %1938 = vmatpush1.bf16.msra.mxu0 %v1318
    %1939 = vmatprep.subr.bf16.mxu0 %v1311
    %1940 = vmatpush1.bf16.msra.mxu0 %v1310
    %1941 = vmatprep.subr.bf16.mxu0 %v1303
    %1942 = vmatpush1.bf16.msra.mxu0 %v1302
    %1943 = vmatprep.subr.bf16.mxu0 %v1295
    %1944 = vmatpush1.bf16.msra.mxu0 %v1294
    %1945 = vmatprep.subr.bf16.mxu0 %v1287
    %1946 = vmatpush1.bf16.msra.mxu0 %v1286
    %1947 = vmatprep.subr.bf16.mxu0 %v1279
    %1948 = vmatpush1.bf16.msra.mxu0 %v1278
    %1949 = vmatprep.subr.bf16.mxu0 %v1271
    %1950 = vmatpush1.bf16.msra.mxu0 %v1270
    %1951 = vmatprep.subr.bf16.mxu0 %v1391
    %1952 = vmatpush2.bf16.msra.mxu0 %v1390
    %1953 = vmatprep.subr.bf16.mxu0 %v1383
    %1954 = vmatpush2.bf16.msra.mxu0 %v1382
    %1955 = vmatprep.subr.bf16.mxu0 %v1375
    %1956 = vmatpush2.bf16.msra.mxu0 %v1374
    %1957 = vmatprep.subr.bf16.mxu0 %v1367
    %1958 = vmatpush2.bf16.msra.mxu0 %v1366
    %1959 = vmatprep.subr.bf16.mxu0 %v1359
    %1960 = vmatpush2.bf16.msra.mxu0 %v1358
    %1961 = vmatprep.subr.bf16.mxu0 %v1351
    %1962 = vmatpush2.bf16.msra.mxu0 %v1350
    %1963 = vmatprep.subr.bf16.mxu0 %v1343
    %1964 = vmatpush2.bf16.msra.mxu0 %v1342
    %1965 = vmatprep.subr.bf16.mxu0 %v1335
    %1966 = vmatpush2.bf16.msra.mxu0 %v1334
    %1967 = vmatprep.mubr.bf16.mxu0 %v69
    %1968 = vmatmul.mubr.bf16.gmra.mxu0 %v68
    %v1969 = vpop.f32.mrf.mxu0
    %v1970 = vadd.f32 %v1929, %v1969
    %v1971 = vpop.f32.mrf.mxu0
    %v1972 = vadd.f32 %v1931, %v1971
    %v1973 = vpop.f32.mrf.mxu0
    %v1974 = vpop.f32.mrf.mxu0
    %1975 = vdwg.mxu0
    %vm1976 = vcmp.gt.f32.partialorder %v1724, 0.0
    %vm1977 = vcmp.gt.f32.partialorder %v1726, 0.0
    %vm1978 = vcmp.gt.f32.partialorder %v1806, 0.0
    %vm1979 = vcmp.gt.f32.partialorder %v1808, 0.0
    %vm1980 = vcmp.gt.f32.partialorder %v1888, 0.0
    %vm1981 = vcmp.gt.f32.partialorder %v1890, 0.0
    %vm1982 = vcmp.gt.f32.partialorder %v1970, 0.0
    %vm1983 = vcmp.gt.f32.partialorder %v1972, 0.0
    %v1984 = vmin.f32 %v1724, 0.0
    %v1985 = vmin.f32 %v1726, 0.0
    %v1986 = vmin.f32 %v1806, 0.0
    %v1987 = vmin.f32 %v1808, 0.0
    %v1988 = vmin.f32 %v1888, 0.0
    %v1989 = vmin.f32 %v1890, 0.0
    %v1990 = vmin.f32 %v1970, 0.0
    %v1991 = vmin.f32 %v1972, 0.0
    %v1992 = vmul.f32 %v1984, 1.442695
    %v1993 = vpow.pop %v1992
    %v1994 = vmul.f32 %v1985, 1.442695
    %v1995 = vpow.pop %v1994
    %v1996 = vmul.f32 %v1986, 1.442695
    %v1997 = vpow.pop %v1996
    %v1998 = vmul.f32 %v1987, 1.442695
    %v1999 = vpow.pop %v1998
    %v2000 = vmul.f32 %v1988, 1.442695
    %v2001 = vpow.pop %v2000
    %v2002 = vmul.f32 %v1989, 1.442695
    %v2003 = vpow.pop %v2002
    %v2004 = vmul.f32 %v1990, 1.442695
    %v2005 = vpow.pop %v2004
    %v2006 = vmul.f32 %v1991, 1.442695
    %v2007 = vpow.pop %v2006
    %v2008 = vsub.f32 %v1993, 1.0
    %v2009 = vsub.f32 %v1995, 1.0
    %v2010 = vsub.f32 %v1997, 1.0
    %v2011 = vsub.f32 %v1999, 1.0
    %v2012 = vsub.f32 %v2001, 1.0
    %v2013 = vsub.f32 %v2003, 1.0
    %v2014 = vsub.f32 %v2005, 1.0
    %v2015 = vsub.f32 %v2007, 1.0
    %v2016 = vsel %vm1976, %v1724, %v2008
    %v2017 = vsel %vm1977, %v1726, %v2009
    %v2018 = vsel %vm1978, %v1806, %v2010
    %v2019 = vsel %vm1979, %v1808, %v2011
    %v2020 = vsel %vm1980, %v1888, %v2012
    %v2021 = vsel %vm1981, %v1890, %v2013
    %v2022 = vsel %vm1982, %v1970, %v2014
    %v2023 = vsel %vm1983, %v1972, %v2015
    %v2024 = vpack.c.bf16 %v2016, %v2016
    %v2025 = vpack.c.bf16 %v2017, %v2017
    %v2026 = vpack.c.bf16 %v2018, %v2018
    %v2027 = vpack.c.bf16 %v2019, %v2019
    %v2028 = vpack.c.bf16 %v2020, %v2020
    %v2029 = vpack.c.bf16 %v2021, %v2021
    %v2030 = vpack.c.bf16 %v2022, %v2022
    %v2031 = vpack.c.bf16 %v2023, %v2023
    %v2032 = vld [vmem:[#allocation4] sm:$0xff]
    %v2033 = vld [vmem:[#allocation4 + $0x8] sm:$0xff]
    %v2034 = vld [vmem:[#allocation4 + $0x10] sm:$0xff]
    %v2035 = vld [vmem:[#allocation4 + $0x18] sm:$0xff]
    %v2036 = vld [vmem:[#allocation4 + $0x20] sm:$0xff]
    %v2037 = vld [vmem:[#allocation4 + $0x28] sm:$0xff]
    %v2038 = vld [vmem:[#allocation4 + $0x30] sm:$0xff]
    %v2039 = vld [vmem:[#allocation4 + $0x38] sm:$0xff]
    %v2040 = vld [vmem:[#allocation4 + $0x40] sm:$0xff]
    %v2041 = vld [vmem:[#allocation4 + $0x48] sm:$0xff]
    %v2042 = vld [vmem:[#allocation4 + $0x50] sm:$0xff]
    %v2043 = vld [vmem:[#allocation4 + $0x58] sm:$0xff]
    %v2044 = vld [vmem:[#allocation4 + $0x60] sm:$0xff]
    %v2045 = vld [vmem:[#allocation4 + $0x68] sm:$0xff]
    %v2046 = vld [vmem:[#allocation4 + $0x70] sm:$0xff]
    %v2047 = vld [vmem:[#allocation4 + $0x78] sm:$0xff]
    %v2048 = vld [vmem:[#allocation4 + $0x80] sm:$0xff]
    %v2049 = vld [vmem:[#allocation4 + $0x88] sm:$0xff]
    %v2050 = vld [vmem:[#allocation4 + $0x90] sm:$0xff]
    %v2051 = vld [vmem:[#allocation4 + $0x98] sm:$0xff]
    %v2052 = vld [vmem:[#allocation4 + $0xa0] sm:$0xff]
    %v2053 = vld [vmem:[#allocation4 + $0xa8] sm:$0xff]
    %v2054 = vld [vmem:[#allocation4 + $0xb0] sm:$0xff]
    %v2055 = vld [vmem:[#allocation4 + $0xb8] sm:$0xff]
    %v2056 = vld [vmem:[#allocation4 + $0xc0] sm:$0xff]
    %v2057 = vld [vmem:[#allocation4 + $0xc8] sm:$0xff]
    %v2058 = vld [vmem:[#allocation4 + $0xd0] sm:$0xff]
    %v2059 = vld [vmem:[#allocation4 + $0xd8] sm:$0xff]
    %v2060 = vld [vmem:[#allocation4 + $0xe0] sm:$0xff]
    %v2061 = vld [vmem:[#allocation4 + $0xe8] sm:$0xff]
    %v2062 = vld [vmem:[#allocation4 + $0xf0] sm:$0xff]
    %v2063 = vld [vmem:[#allocation4 + $0xf8] sm:$0xff]
    %v2064 = vld [vmem:[#allocation4 + $0x100] sm:$0xff]
    %v2065 = vld [vmem:[#allocation4 + $0x108] sm:$0xff]
    %v2066 = vld [vmem:[#allocation4 + $0x110] sm:$0xff]
    %v2067 = vld [vmem:[#allocation4 + $0x118] sm:$0xff]
    %v2068 = vld [vmem:[#allocation4 + $0x120] sm:$0xff]
    %v2069 = vld [vmem:[#allocation4 + $0x128] sm:$0xff]
    %v2070 = vld [vmem:[#allocation4 + $0x130] sm:$0xff]
    %v2071 = vld [vmem:[#allocation4 + $0x138] sm:$0xff]
    %v2072 = vld [vmem:[#allocation4 + $0x140] sm:$0xff]
    %v2073 = vld [vmem:[#allocation4 + $0x148] sm:$0xff]
    %v2074 = vld [vmem:[#allocation4 + $0x150] sm:$0xff]
    %v2075 = vld [vmem:[#allocation4 + $0x158] sm:$0xff]
    %v2076 = vld [vmem:[#allocation4 + $0x160] sm:$0xff]
    %v2077 = vld [vmem:[#allocation4 + $0x168] sm:$0xff]
    %v2078 = vld [vmem:[#allocation4 + $0x170] sm:$0xff]
    %v2079 = vld [vmem:[#allocation4 + $0x178] sm:$0xff]
    %v2080 = vld [vmem:[#allocation4 + $0x180] sm:$0xff]
    %v2081 = vld [vmem:[#allocation4 + $0x188] sm:$0xff]
    %v2082 = vld [vmem:[#allocation4 + $0x190] sm:$0xff]
    %v2083 = vld [vmem:[#allocation4 + $0x198] sm:$0xff]
    %v2084 = vld [vmem:[#allocation4 + $0x1a0] sm:$0xff]
    %v2085 = vld [vmem:[#allocation4 + $0x1a8] sm:$0xff]
    %v2086 = vld [vmem:[#allocation4 + $0x1b0] sm:$0xff]
    %v2087 = vld [vmem:[#allocation4 + $0x1b8] sm:$0xff]
    %v2088 = vld [vmem:[#allocation4 + $0x1c0] sm:$0xff]
    %v2089 = vld [vmem:[#allocation4 + $0x1c8] sm:$0xff]
    %v2090 = vld [vmem:[#allocation4 + $0x1d0] sm:$0xff]
    %v2091 = vld [vmem:[#allocation4 + $0x1d8] sm:$0xff]
    %v2092 = vld [vmem:[#allocation4 + $0x1e0] sm:$0xff]
    %v2093 = vld [vmem:[#allocation4 + $0x1e8] sm:$0xff]
    %v2094 = vld [vmem:[#allocation4 + $0x1f0] sm:$0xff]
    %v2095 = vld [vmem:[#allocation4 + $0x1f8] sm:$0xff]
    %v2096 = vld [vmem:[#allocation4 + $0x200] sm:$0xff]
    %v2097 = vld [vmem:[#allocation4 + $0x208] sm:$0xff]
    %v2098 = vld [vmem:[#allocation4 + $0x210] sm:$0xff]
    %v2099 = vld [vmem:[#allocation4 + $0x218] sm:$0xff]
    %v2100 = vld [vmem:[#allocation4 + $0x220] sm:$0xff]
    %v2101 = vld [vmem:[#allocation4 + $0x228] sm:$0xff]
    %v2102 = vld [vmem:[#allocation4 + $0x230] sm:$0xff]
    %v2103 = vld [vmem:[#allocation4 + $0x238] sm:$0xff]
    %v2104 = vld [vmem:[#allocation4 + $0x240] sm:$0xff]
    %v2105 = vld [vmem:[#allocation4 + $0x248] sm:$0xff]
    %v2106 = vld [vmem:[#allocation4 + $0x250] sm:$0xff]
    %v2107 = vld [vmem:[#allocation4 + $0x258] sm:$0xff]
    %v2108 = vld [vmem:[#allocation4 + $0x260] sm:$0xff]
    %v2109 = vld [vmem:[#allocation4 + $0x268] sm:$0xff]
    %v2110 = vld [vmem:[#allocation4 + $0x270] sm:$0xff]
    %v2111 = vld [vmem:[#allocation4 + $0x278] sm:$0xff]
    %v2112 = vld [vmem:[#allocation4 + $0x280] sm:$0xff]
    %v2113 = vld [vmem:[#allocation4 + $0x288] sm:$0xff]
    %v2114 = vld [vmem:[#allocation4 + $0x290] sm:$0xff]
    %v2115 = vld [vmem:[#allocation4 + $0x298] sm:$0xff]
    %v2116 = vld [vmem:[#allocation4 + $0x2a0] sm:$0xff]
    %v2117 = vld [vmem:[#allocation4 + $0x2a8] sm:$0xff]
    %v2118 = vld [vmem:[#allocation4 + $0x2b0] sm:$0xff]
    %v2119 = vld [vmem:[#allocation4 + $0x2b8] sm:$0xff]
    %v2120 = vld [vmem:[#allocation4 + $0x2c0] sm:$0xff]
    %v2121 = vld [vmem:[#allocation4 + $0x2c8] sm:$0xff]
    %v2122 = vld [vmem:[#allocation4 + $0x2d0] sm:$0xff]
    %v2123 = vld [vmem:[#allocation4 + $0x2d8] sm:$0xff]
    %v2124 = vld [vmem:[#allocation4 + $0x2e0] sm:$0xff]
    %v2125 = vld [vmem:[#allocation4 + $0x2e8] sm:$0xff]
    %v2126 = vld [vmem:[#allocation4 + $0x2f0] sm:$0xff]
    %v2127 = vld [vmem:[#allocation4 + $0x2f8] sm:$0xff]
    %v2128 = vld [vmem:[#allocation4 + $0x300] sm:$0xff]
    %v2129 = vld [vmem:[#allocation4 + $0x308] sm:$0xff]
    %v2130 = vld [vmem:[#allocation4 + $0x310] sm:$0xff]
    %v2131 = vld [vmem:[#allocation4 + $0x318] sm:$0xff]
    %v2132 = vld [vmem:[#allocation4 + $0x320] sm:$0xff]
    %v2133 = vld [vmem:[#allocation4 + $0x328] sm:$0xff]
    %v2134 = vld [vmem:[#allocation4 + $0x330] sm:$0xff]
    %v2135 = vld [vmem:[#allocation4 + $0x338] sm:$0xff]
    %v2136 = vld [vmem:[#allocation4 + $0x340] sm:$0xff]
    %v2137 = vld [vmem:[#allocation4 + $0x348] sm:$0xff]
    %v2138 = vld [vmem:[#allocation4 + $0x350] sm:$0xff]
    %v2139 = vld [vmem:[#allocation4 + $0x358] sm:$0xff]
    %v2140 = vld [vmem:[#allocation4 + $0x360] sm:$0xff]
    %v2141 = vld [vmem:[#allocation4 + $0x368] sm:$0xff]
    %v2142 = vld [vmem:[#allocation4 + $0x370] sm:$0xff]
    %v2143 = vld [vmem:[#allocation4 + $0x378] sm:$0xff]
    %v2144 = vld [vmem:[#allocation4 + $0x380] sm:$0xff]
    %v2145 = vld [vmem:[#allocation4 + $0x388] sm:$0xff]
    %v2146 = vld [vmem:[#allocation4 + $0x390] sm:$0xff]
    %v2147 = vld [vmem:[#allocation4 + $0x398] sm:$0xff]
    %v2148 = vld [vmem:[#allocation4 + $0x3a0] sm:$0xff]
    %v2149 = vld [vmem:[#allocation4 + $0x3a8] sm:$0xff]
    %v2150 = vld [vmem:[#allocation4 + $0x3b0] sm:$0xff]
    %v2151 = vld [vmem:[#allocation4 + $0x3b8] sm:$0xff]
    %v2152 = vld [vmem:[#allocation4 + $0x3c0] sm:$0xff]
    %v2153 = vld [vmem:[#allocation4 + $0x3c8] sm:$0xff]
    %v2154 = vld [vmem:[#allocation4 + $0x3d0] sm:$0xff]
    %v2155 = vld [vmem:[#allocation4 + $0x3d8] sm:$0xff]
    %v2156 = vld [vmem:[#allocation4 + $0x3e0] sm:$0xff]
    %v2157 = vld [vmem:[#allocation4 + $0x3e8] sm:$0xff]
    %v2158 = vld [vmem:[#allocation4 + $0x3f0] sm:$0xff]
    %v2159 = vld [vmem:[#allocation4 + $0x3f8] sm:$0xff]
    %s2160 = scalar_lea.vmem %s4, 1
    %v2161 = vld [vmem:[%s2160] ss:$4 sm:$0x3]
    %v2163 = vlaneseq
    %v2164 = vshrl.u32 %v2163, 7
    %v2165 = vsub.s32 0, %v2164
    %v2166 = vrot.slane %v2161, %v2165
    %v2167 = vlaneseq
    %v2168 = vshrl.u32 %v2167, 7
    %v2169 = vsub.s32 1, %v2168
    %v2170 = vrot.slane %v2161, %v2169
    %v2301 = vunpack.c.l.b16 %v2032
    %v2302 = vunpack.c.h.b16 %v2032
    %v2303 = vunpack.c.l.b16 %v2033
    %v2304 = vunpack.c.h.b16 %v2033
    %v2305 = vunpack.c.l.b16 %v2034
    %v2306 = vunpack.c.h.b16 %v2034
    %v2307 = vunpack.c.l.b16 %v2035
    %v2308 = vunpack.c.h.b16 %v2035
    %v2309 = vunpack.c.l.b16 %v2036
    %v2310 = vunpack.c.h.b16 %v2036
    %v2311 = vunpack.c.l.b16 %v2037
    %v2312 = vunpack.c.h.b16 %v2037
    %v2313 = vunpack.c.l.b16 %v2038
    %v2314 = vunpack.c.h.b16 %v2038
    %v2315 = vunpack.c.l.b16 %v2039
    %v2316 = vunpack.c.h.b16 %v2039
    %v2317 = vunpack.c.l.b16 %v2040
    %v2318 = vunpack.c.h.b16 %v2040
    %v2319 = vunpack.c.l.b16 %v2041
    %v2320 = vunpack.c.h.b16 %v2041
    %v2321 = vunpack.c.l.b16 %v2042
    %v2322 = vunpack.c.h.b16 %v2042
    %v2323 = vunpack.c.l.b16 %v2043
    %v2324 = vunpack.c.h.b16 %v2043
    %v2325 = vunpack.c.l.b16 %v2044
    %v2326 = vunpack.c.h.b16 %v2044
    %v2327 = vunpack.c.l.b16 %v2045
    %v2328 = vunpack.c.h.b16 %v2045
    %v2329 = vunpack.c.l.b16 %v2046
    %v2330 = vunpack.c.h.b16 %v2046
    %v2331 = vunpack.c.l.b16 %v2047
    %v2332 = vunpack.c.h.b16 %v2047
    %v2333 = vunpack.c.l.b16 %v2048
    %v2334 = vunpack.c.h.b16 %v2048
    %v2335 = vunpack.c.l.b16 %v2049
    %v2336 = vunpack.c.h.b16 %v2049
    %v2337 = vunpack.c.l.b16 %v2050
    %v2338 = vunpack.c.h.b16 %v2050
    %v2339 = vunpack.c.l.b16 %v2051
    %v2340 = vunpack.c.h.b16 %v2051
    %v2341 = vunpack.c.l.b16 %v2052
    %v2342 = vunpack.c.h.b16 %v2052
    %v2343 = vunpack.c.l.b16 %v2053
    %v2344 = vunpack.c.h.b16 %v2053
    %v2345 = vunpack.c.l.b16 %v2054
    %v2346 = vunpack.c.h.b16 %v2054
    %v2347 = vunpack.c.l.b16 %v2055
    %v2348 = vunpack.c.h.b16 %v2055
    %v2349 = vunpack.c.l.b16 %v2056
    %v2350 = vunpack.c.h.b16 %v2056
    %v2351 = vunpack.c.l.b16 %v2057
    %v2352 = vunpack.c.h.b16 %v2057
    %v2353 = vunpack.c.l.b16 %v2058
    %v2354 = vunpack.c.h.b16 %v2058
    %v2355 = vunpack.c.l.b16 %v2059
    %v2356 = vunpack.c.h.b16 %v2059
    %v2357 = vunpack.c.l.b16 %v2060
    %v2358 = vunpack.c.h.b16 %v2060
    %v2359 = vunpack.c.l.b16 %v2061
    %v2360 = vunpack.c.h.b16 %v2061
    %v2361 = vunpack.c.l.b16 %v2062
    %v2362 = vunpack.c.h.b16 %v2062
    %v2363 = vunpack.c.l.b16 %v2063
    %v2364 = vunpack.c.h.b16 %v2063
    %v2365 = vunpack.c.l.b16 %v2064
    %v2366 = vunpack.c.h.b16 %v2064
    %v2367 = vunpack.c.l.b16 %v2065
    %v2368 = vunpack.c.h.b16 %v2065
    %v2369 = vunpack.c.l.b16 %v2066
    %v2370 = vunpack.c.h.b16 %v2066
    %v2371 = vunpack.c.l.b16 %v2067
    %v2372 = vunpack.c.h.b16 %v2067
    %v2373 = vunpack.c.l.b16 %v2068
    %v2374 = vunpack.c.h.b16 %v2068
    %v2375 = vunpack.c.l.b16 %v2069
    %v2376 = vunpack.c.h.b16 %v2069
    %v2377 = vunpack.c.l.b16 %v2070
    %v2378 = vunpack.c.h.b16 %v2070
    %v2379 = vunpack.c.l.b16 %v2071
    %v2380 = vunpack.c.h.b16 %v2071
    %v2381 = vunpack.c.l.b16 %v2072
    %v2382 = vunpack.c.h.b16 %v2072
    %v2383 = vunpack.c.l.b16 %v2073
    %v2384 = vunpack.c.h.b16 %v2073
    %v2385 = vunpack.c.l.b16 %v2074
    %v2386 = vunpack.c.h.b16 %v2074
    %v2387 = vunpack.c.l.b16 %v2075
    %v2388 = vunpack.c.h.b16 %v2075
    %v2389 = vunpack.c.l.b16 %v2076
    %v2390 = vunpack.c.h.b16 %v2076
    %v2391 = vunpack.c.l.b16 %v2077
    %v2392 = vunpack.c.h.b16 %v2077
    %v2393 = vunpack.c.l.b16 %v2078
    %v2394 = vunpack.c.h.b16 %v2078
    %v2395 = vunpack.c.l.b16 %v2079
    %v2396 = vunpack.c.h.b16 %v2079
    %v2397 = vunpack.c.l.b16 %v2080
    %v2398 = vunpack.c.h.b16 %v2080
    %v2399 = vunpack.c.l.b16 %v2081
    %v2400 = vunpack.c.h.b16 %v2081
    %v2401 = vunpack.c.l.b16 %v2082
    %v2402 = vunpack.c.h.b16 %v2082
    %v2403 = vunpack.c.l.b16 %v2083
    %v2404 = vunpack.c.h.b16 %v2083
    %v2405 = vunpack.c.l.b16 %v2084
    %v2406 = vunpack.c.h.b16 %v2084
    %v2407 = vunpack.c.l.b16 %v2085
    %v2408 = vunpack.c.h.b16 %v2085
    %v2409 = vunpack.c.l.b16 %v2086
    %v2410 = vunpack.c.h.b16 %v2086
    %v2411 = vunpack.c.l.b16 %v2087
    %v2412 = vunpack.c.h.b16 %v2087
    %v2413 = vunpack.c.l.b16 %v2088
    %v2414 = vunpack.c.h.b16 %v2088
    %v2415 = vunpack.c.l.b16 %v2089
    %v2416 = vunpack.c.h.b16 %v2089
    %v2417 = vunpack.c.l.b16 %v2090
    %v2418 = vunpack.c.h.b16 %v2090
    %v2419 = vunpack.c.l.b16 %v2091
    %v2420 = vunpack.c.h.b16 %v2091
    %v2421 = vunpack.c.l.b16 %v2092
    %v2422 = vunpack.c.h.b16 %v2092
    %v2423 = vunpack.c.l.b16 %v2093
    %v2424 = vunpack.c.h.b16 %v2093
    %v2425 = vunpack.c.l.b16 %v2094
    %v2426 = vunpack.c.h.b16 %v2094
    %v2427 = vunpack.c.l.b16 %v2095
    %v2428 = vunpack.c.h.b16 %v2095
    %v2429 = vunpack.c.l.b16 %v2096
    %v2430 = vunpack.c.h.b16 %v2096
    %v2431 = vunpack.c.l.b16 %v2097
    %v2432 = vunpack.c.h.b16 %v2097
    %v2433 = vunpack.c.l.b16 %v2098
    %v2434 = vunpack.c.h.b16 %v2098
    %v2435 = vunpack.c.l.b16 %v2099
    %v2436 = vunpack.c.h.b16 %v2099
    %v2437 = vunpack.c.l.b16 %v2100
    %v2438 = vunpack.c.h.b16 %v2100
    %v2439 = vunpack.c.l.b16 %v2101
    %v2440 = vunpack.c.h.b16 %v2101
    %v2441 = vunpack.c.l.b16 %v2102
    %v2442 = vunpack.c.h.b16 %v2102
    %v2443 = vunpack.c.l.b16 %v2103
    %v2444 = vunpack.c.h.b16 %v2103
    %v2445 = vunpack.c.l.b16 %v2104
    %v2446 = vunpack.c.h.b16 %v2104
    %v2447 = vunpack.c.l.b16 %v2105
    %v2448 = vunpack.c.h.b16 %v2105
    %v2449 = vunpack.c.l.b16 %v2106
    %v2450 = vunpack.c.h.b16 %v2106
    %v2451 = vunpack.c.l.b16 %v2107
    %v2452 = vunpack.c.h.b16 %v2107
    %v2453 = vunpack.c.l.b16 %v2108
    %v2454 = vunpack.c.h.b16 %v2108
    %v2455 = vunpack.c.l.b16 %v2109
    %v2456 = vunpack.c.h.b16 %v2109
    %v2457 = vunpack.c.l.b16 %v2110
    %v2458 = vunpack.c.h.b16 %v2110
    %v2459 = vunpack.c.l.b16 %v2111
    %v2460 = vunpack.c.h.b16 %v2111
    %v2461 = vunpack.c.l.b16 %v2112
    %v2462 = vunpack.c.h.b16 %v2112
    %v2463 = vunpack.c.l.b16 %v2113
    %v2464 = vunpack.c.h.b16 %v2113
    %v2465 = vunpack.c.l.b16 %v2114
    %v2466 = vunpack.c.h.b16 %v2114
    %v2467 = vunpack.c.l.b16 %v2115
    %v2468 = vunpack.c.h.b16 %v2115
    %v2469 = vunpack.c.l.b16 %v2116
    %v2470 = vunpack.c.h.b16 %v2116
    %v2471 = vunpack.c.l.b16 %v2117
    %v2472 = vunpack.c.h.b16 %v2117
    %v2473 = vunpack.c.l.b16 %v2118
    %v2474 = vunpack.c.h.b16 %v2118
    %v2475 = vunpack.c.l.b16 %v2119
    %v2476 = vunpack.c.h.b16 %v2119
    %v2477 = vunpack.c.l.b16 %v2120
    %v2478 = vunpack.c.h.b16 %v2120
    %v2479 = vunpack.c.l.b16 %v2121
    %v2480 = vunpack.c.h.b16 %v2121
    %v2481 = vunpack.c.l.b16 %v2122
    %v2482 = vunpack.c.h.b16 %v2122
    %v2483 = vunpack.c.l.b16 %v2123
    %v2484 = vunpack.c.h.b16 %v2123
    %v2485 = vunpack.c.l.b16 %v2124
    %v2486 = vunpack.c.h.b16 %v2124
    %v2487 = vunpack.c.l.b16 %v2125
    %v2488 = vunpack.c.h.b16 %v2125
    %v2489 = vunpack.c.l.b16 %v2126
    %v2490 = vunpack.c.h.b16 %v2126
    %v2491 = vunpack.c.l.b16 %v2127
    %v2492 = vunpack.c.h.b16 %v2127
    %v2493 = vunpack.c.l.b16 %v2128
    %v2494 = vunpack.c.h.b16 %v2128
    %v2495 = vunpack.c.l.b16 %v2129
    %v2496 = vunpack.c.h.b16 %v2129
    %v2497 = vunpack.c.l.b16 %v2130
    %v2498 = vunpack.c.h.b16 %v2130
    %v2499 = vunpack.c.l.b16 %v2131
    %v2500 = vunpack.c.h.b16 %v2131
    %v2501 = vunpack.c.l.b16 %v2132
    %v2502 = vunpack.c.h.b16 %v2132
    %v2503 = vunpack.c.l.b16 %v2133
    %v2504 = vunpack.c.h.b16 %v2133
    %v2505 = vunpack.c.l.b16 %v2134
    %v2506 = vunpack.c.h.b16 %v2134
    %v2507 = vunpack.c.l.b16 %v2135
    %v2508 = vunpack.c.h.b16 %v2135
    %v2509 = vunpack.c.l.b16 %v2136
    %v2510 = vunpack.c.h.b16 %v2136
    %v2511 = vunpack.c.l.b16 %v2137
    %v2512 = vunpack.c.h.b16 %v2137
    %v2513 = vunpack.c.l.b16 %v2138
    %v2514 = vunpack.c.h.b16 %v2138
    %v2515 = vunpack.c.l.b16 %v2139
    %v2516 = vunpack.c.h.b16 %v2139
    %v2517 = vunpack.c.l.b16 %v2140
    %v2518 = vunpack.c.h.b16 %v2140
    %v2519 = vunpack.c.l.b16 %v2141
    %v2520 = vunpack.c.h.b16 %v2141
    %v2521 = vunpack.c.l.b16 %v2142
    %v2522 = vunpack.c.h.b16 %v2142
    %v2523 = vunpack.c.l.b16 %v2143
    %v2524 = vunpack.c.h.b16 %v2143
    %v2525 = vunpack.c.l.b16 %v2144
    %v2526 = vunpack.c.h.b16 %v2144
    %v2527 = vunpack.c.l.b16 %v2145
    %v2528 = vunpack.c.h.b16 %v2145
    %v2529 = vunpack.c.l.b16 %v2146
    %v2530 = vunpack.c.h.b16 %v2146
    %v2531 = vunpack.c.l.b16 %v2147
    %v2532 = vunpack.c.h.b16 %v2147
    %v2533 = vunpack.c.l.b16 %v2148
    %v2534 = vunpack.c.h.b16 %v2148
    %v2535 = vunpack.c.l.b16 %v2149
    %v2536 = vunpack.c.h.b16 %v2149
    %v2537 = vunpack.c.l.b16 %v2150
    %v2538 = vunpack.c.h.b16 %v2150
    %v2539 = vunpack.c.l.b16 %v2151
    %v2540 = vunpack.c.h.b16 %v2151
    %v2541 = vunpack.c.l.b16 %v2152
    %v2542 = vunpack.c.h.b16 %v2152
    %v2543 = vunpack.c.l.b16 %v2153
    %v2544 = vunpack.c.h.b16 %v2153
    %v2545 = vunpack.c.l.b16 %v2154
    %v2546 = vunpack.c.h.b16 %v2154
    %v2547 = vunpack.c.l.b16 %v2155
    %v2548 = vunpack.c.h.b16 %v2155
    %v2549 = vunpack.c.l.b16 %v2156
    %v2550 = vunpack.c.h.b16 %v2156
    %v2551 = vunpack.c.l.b16 %v2157
    %v2552 = vunpack.c.h.b16 %v2157
    %v2553 = vunpack.c.l.b16 %v2158
    %v2554 = vunpack.c.h.b16 %v2158
    %v2555 = vunpack.c.l.b16 %v2159
    %v2556 = vunpack.c.h.b16 %v2159
    %v2557 = vpack.c.b16 %v2303, %v2301
    %v2558 = vpack.c.b16 %v2304, %v2302
    %v2559 = vpack.c.b16 %v2307, %v2305
    %v2560 = vpack.c.b16 %v2308, %v2306
    %v2561 = vpack.c.b16 %v2311, %v2309
    %v2562 = vpack.c.b16 %v2312, %v2310
    %v2563 = vpack.c.b16 %v2315, %v2313
    %v2564 = vpack.c.b16 %v2316, %v2314
    %v2565 = vpack.c.b16 %v2319, %v2317
    %v2566 = vpack.c.b16 %v2320, %v2318
    %v2567 = vpack.c.b16 %v2323, %v2321
    %v2568 = vpack.c.b16 %v2324, %v2322
    %v2569 = vpack.c.b16 %v2327, %v2325
    %v2570 = vpack.c.b16 %v2328, %v2326
    %v2571 = vpack.c.b16 %v2331, %v2329
    %v2572 = vpack.c.b16 %v2332, %v2330
    %v2573 = vpack.c.b16 %v2335, %v2333
    %v2574 = vpack.c.b16 %v2336, %v2334
    %v2575 = vpack.c.b16 %v2339, %v2337
    %v2576 = vpack.c.b16 %v2340, %v2338
    %v2577 = vpack.c.b16 %v2343, %v2341
    %v2578 = vpack.c.b16 %v2344, %v2342
    %v2579 = vpack.c.b16 %v2347, %v2345
    %v2580 = vpack.c.b16 %v2348, %v2346
    %v2581 = vpack.c.b16 %v2351, %v2349
    %v2582 = vpack.c.b16 %v2352, %v2350
    %v2583 = vpack.c.b16 %v2355, %v2353
    %v2584 = vpack.c.b16 %v2356, %v2354
    %v2585 = vpack.c.b16 %v2359, %v2357
    %v2586 = vpack.c.b16 %v2360, %v2358
    %v2587 = vpack.c.b16 %v2363, %v2361
    %v2588 = vpack.c.b16 %v2364, %v2362
    %v2589 = vpack.c.b16 %v2367, %v2365
    %v2590 = vpack.c.b16 %v2368, %v2366
    %v2591 = vpack.c.b16 %v2371, %v2369
    %v2592 = vpack.c.b16 %v2372, %v2370
    %v2593 = vpack.c.b16 %v2375, %v2373
    %v2594 = vpack.c.b16 %v2376, %v2374
    %v2595 = vpack.c.b16 %v2379, %v2377
    %v2596 = vpack.c.b16 %v2380, %v2378
    %v2597 = vpack.c.b16 %v2383, %v2381
    %v2598 = vpack.c.b16 %v2384, %v2382
    %v2599 = vpack.c.b16 %v2387, %v2385
    %v2600 = vpack.c.b16 %v2388, %v2386
    %v2601 = vpack.c.b16 %v2391, %v2389
    %v2602 = vpack.c.b16 %v2392, %v2390
    %v2603 = vpack.c.b16 %v2395, %v2393
    %v2604 = vpack.c.b16 %v2396, %v2394
    %v2605 = vpack.c.b16 %v2399, %v2397
    %v2606 = vpack.c.b16 %v2400, %v2398
    %v2607 = vpack.c.b16 %v2403, %v2401
    %v2608 = vpack.c.b16 %v2404, %v2402
    %v2609 = vpack.c.b16 %v2407, %v2405
    %v2610 = vpack.c.b16 %v2408, %v2406
    %v2611 = vpack.c.b16 %v2411, %v2409
    %v2612 = vpack.c.b16 %v2412, %v2410
    %v2613 = vpack.c.b16 %v2415, %v2413
    %v2614 = vpack.c.b16 %v2416, %v2414
    %v2615 = vpack.c.b16 %v2419, %v2417
    %v2616 = vpack.c.b16 %v2420, %v2418
    %v2617 = vpack.c.b16 %v2423, %v2421
    %v2618 = vpack.c.b16 %v2424, %v2422
    %v2619 = vpack.c.b16 %v2427, %v2425
    %v2620 = vpack.c.b16 %v2428, %v2426
    %v2621 = vpack.c.b16 %v2431, %v2429
    %v2622 = vpack.c.b16 %v2432, %v2430
    %v2623 = vpack.c.b16 %v2435, %v2433
    %v2624 = vpack.c.b16 %v2436, %v2434
    %v2625 = vpack.c.b16 %v2439, %v2437
    %v2626 = vpack.c.b16 %v2440, %v2438
    %v2627 = vpack.c.b16 %v2443, %v2441
    %v2628 = vpack.c.b16 %v2444, %v2442
    %v2629 = vpack.c.b16 %v2447, %v2445
    %v2630 = vpack.c.b16 %v2448, %v2446
    %v2631 = vpack.c.b16 %v2451, %v2449
    %v2632 = vpack.c.b16 %v2452, %v2450
    %v2633 = vpack.c.b16 %v2455, %v2453
    %v2634 = vpack.c.b16 %v2456, %v2454
    %v2635 = vpack.c.b16 %v2459, %v2457
    %v2636 = vpack.c.b16 %v2460, %v2458
    %v2637 = vpack.c.b16 %v2463, %v2461
    %v2638 = vpack.c.b16 %v2464, %v2462
    %v2639 = vpack.c.b16 %v2467, %v2465
    %v2640 = vpack.c.b16 %v2468, %v2466
    %v2641 = vpack.c.b16 %v2471, %v2469
    %v2642 = vpack.c.b16 %v2472, %v2470
    %v2643 = vpack.c.b16 %v2475, %v2473
    %v2644 = vpack.c.b16 %v2476, %v2474
    %v2645 = vpack.c.b16 %v2479, %v2477
    %v2646 = vpack.c.b16 %v2480, %v2478
    %v2647 = vpack.c.b16 %v2483, %v2481
    %v2648 = vpack.c.b16 %v2484, %v2482
    %v2649 = vpack.c.b16 %v2487, %v2485
    %v2650 = vpack.c.b16 %v2488, %v2486
    %v2651 = vpack.c.b16 %v2491, %v2489
    %v2652 = vpack.c.b16 %v2492, %v2490
    %v2653 = vpack.c.b16 %v2495, %v2493
    %v2654 = vpack.c.b16 %v2496, %v2494
    %v2655 = vpack.c.b16 %v2499, %v2497
    %v2656 = vpack.c.b16 %v2500, %v2498
    %v2657 = vpack.c.b16 %v2503, %v2501
    %v2658 = vpack.c.b16 %v2504, %v2502
    %v2659 = vpack.c.b16 %v2507, %v2505
    %v2660 = vpack.c.b16 %v2508, %v2506
    %v2661 = vpack.c.b16 %v2511, %v2509
    %v2662 = vpack.c.b16 %v2512, %v2510
    %v2663 = vpack.c.b16 %v2515, %v2513
    %v2664 = vpack.c.b16 %v2516, %v2514
    %v2665 = vpack.c.b16 %v2519, %v2517
    %v2666 = vpack.c.b16 %v2520, %v2518
    %v2667 = vpack.c.b16 %v2523, %v2521
    %v2668 = vpack.c.b16 %v2524, %v2522
    %v2669 = vpack.c.b16 %v2527, %v2525
    %v2670 = vpack.c.b16 %v2528, %v2526
    %v2671 = vpack.c.b16 %v2531, %v2529
    %v2672 = vpack.c.b16 %v2532, %v2530
    %v2673 = vpack.c.b16 %v2535, %v2533
    %v2674 = vpack.c.b16 %v2536, %v2534
    %v2675 = vpack.c.b16 %v2539, %v2537
    %v2676 = vpack.c.b16 %v2540, %v2538
    %v2677 = vpack.c.b16 %v2543, %v2541
    %v2678 = vpack.c.b16 %v2544, %v2542
    %v2679 = vpack.c.b16 %v2547, %v2545
    %v2680 = vpack.c.b16 %v2548, %v2546
    %v2681 = vpack.c.b16 %v2551, %v2549
    %v2682 = vpack.c.b16 %v2552, %v2550
    %v2683 = vpack.c.b16 %v2555, %v2553
    %v2684 = vpack.c.b16 %v2556, %v2554
    %2813 = vmatprep.subr.bf16.mxu0 %v2572
    %2814 = vmatpush1.bf16.msra.mxu0 %v2571
    %2815 = vmatprep.subr.bf16.mxu0 %v2570
    %2816 = vmatpush1.bf16.msra.mxu0 %v2569
    %2817 = vmatprep.subr.bf16.mxu0 %v2568
    %2818 = vmatpush1.bf16.msra.mxu0 %v2567
    %2819 = vmatprep.subr.bf16.mxu0 %v2566
    %2820 = vmatpush1.bf16.msra.mxu0 %v2565
    %2821 = vmatprep.subr.bf16.mxu0 %v2564
    %2822 = vmatpush1.bf16.msra.mxu0 %v2563
    %2823 = vmatprep.subr.bf16.mxu0 %v2562
    %2824 = vmatpush1.bf16.msra.mxu0 %v2561
    %2825 = vmatprep.subr.bf16.mxu0 %v2560
    %2826 = vmatpush1.bf16.msra.mxu0 %v2559
    %2827 = vmatprep.subr.bf16.mxu0 %v2558
    %2828 = vmatpush1.bf16.msra.mxu0 %v2557
    %2829 = vmatprep.subr.bf16.mxu0 %v2588
    %2830 = vmatpush2.bf16.msra.mxu0 %v2587
    %2831 = vmatprep.subr.bf16.mxu0 %v2586
    %2832 = vmatpush2.bf16.msra.mxu0 %v2585
    %2833 = vmatprep.subr.bf16.mxu0 %v2584
    %2834 = vmatpush2.bf16.msra.mxu0 %v2583
    %2835 = vmatprep.subr.bf16.mxu0 %v2582
    %2836 = vmatpush2.bf16.msra.mxu0 %v2581
    %2837 = vmatprep.subr.bf16.mxu0 %v2580
    %2838 = vmatpush2.bf16.msra.mxu0 %v2579
    %2839 = vmatprep.subr.bf16.mxu0 %v2578
    %2840 = vmatpush2.bf16.msra.mxu0 %v2577
    %2841 = vmatprep.subr.bf16.mxu0 %v2576
    %2842 = vmatpush2.bf16.msra.mxu0 %v2575
    %2843 = vmatprep.subr.bf16.mxu0 %v2574
    %2844 = vmatpush2.bf16.msra.mxu0 %v2573
    %2845 = vmatprep.mubr.bf16.mxu0 %v2025
    %2846 = vmatmul.mubr.bf16.gmra.mxu0 %v2024
    %v2847 = vpop.f32.mrf.mxu0
    %v2848 = vadd.f32 %v2166, %v2847
    %v2849 = vpop.f32.mrf.mxu0
    %v2850 = vadd.f32 %v2170, %v2849
    %v2851 = vpop.f32.mrf.mxu0
    %v2852 = vpop.f32.mrf.mxu0
    %2853 = vdwg.mxu0
    %2854 = vmatprep.subr.bf16.mxu0 %v2604
    %2855 = vmatpush1.bf16.msra.mxu0 %v2603
    %2856 = vmatprep.subr.bf16.mxu0 %v2602
    %2857 = vmatpush1.bf16.msra.mxu0 %v2601
    %2858 = vmatprep.subr.bf16.mxu0 %v2600
    %2859 = vmatpush1.bf16.msra.mxu0 %v2599
    %2860 = vmatprep.subr.bf16.mxu0 %v2598
    %2861 = vmatpush1.bf16.msra.mxu0 %v2597
    %2862 = vmatprep.subr.bf16.mxu0 %v2596
    %2863 = vmatpush1.bf16.msra.mxu0 %v2595
    %2864 = vmatprep.subr.bf16.mxu0 %v2594
    %2865 = vmatpush1.bf16.msra.mxu0 %v2593
    %2866 = vmatprep.subr.bf16.mxu0 %v2592
    %2867 = vmatpush1.bf16.msra.mxu0 %v2591
    %2868 = vmatprep.subr.bf16.mxu0 %v2590
    %2869 = vmatpush1.bf16.msra.mxu0 %v2589
    %2870 = vmatprep.subr.bf16.mxu0 %v2620
    %2871 = vmatpush2.bf16.msra.mxu0 %v2619
    %2872 = vmatprep.subr.bf16.mxu0 %v2618
    %2873 = vmatpush2.bf16.msra.mxu0 %v2617
    %2874 = vmatprep.subr.bf16.mxu0 %v2616
    %2875 = vmatpush2.bf16.msra.mxu0 %v2615
    %2876 = vmatprep.subr.bf16.mxu0 %v2614
    %2877 = vmatpush2.bf16.msra.mxu0 %v2613
    %2878 = vmatprep.subr.bf16.mxu0 %v2612
    %2879 = vmatpush2.bf16.msra.mxu0 %v2611
    %2880 = vmatprep.subr.bf16.mxu0 %v2610
    %2881 = vmatpush2.bf16.msra.mxu0 %v2609
    %2882 = vmatprep.subr.bf16.mxu0 %v2608
    %2883 = vmatpush2.bf16.msra.mxu0 %v2607
    %2884 = vmatprep.subr.bf16.mxu0 %v2606
    %2885 = vmatpush2.bf16.msra.mxu0 %v2605
    %2886 = vmatprep.mubr.bf16.mxu0 %v2027
    %2887 = vmatmul.mubr.bf16.gmra.mxu0 %v2026
    %v2888 = vpop.f32.mrf.mxu0
    %v2889 = vadd.f32 %v2848, %v2888
    %v2890 = vpop.f32.mrf.mxu0
    %v2891 = vadd.f32 %v2850, %v2890
    %v2892 = vpop.f32.mrf.mxu0
    %v2893 = vpop.f32.mrf.mxu0
    %2894 = vdwg.mxu0
    %2895 = vmatprep.subr.bf16.mxu0 %v2636
    %2896 = vmatpush1.bf16.msra.mxu0 %v2635
    %2897 = vmatprep.subr.bf16.mxu0 %v2634
    %2898 = vmatpush1.bf16.msra.mxu0 %v2633
    %2899 = vmatprep.subr.bf16.mxu0 %v2632
    %2900 = vmatpush1.bf16.msra.mxu0 %v2631
    %2901 = vmatprep.subr.bf16.mxu0 %v2630
    %2902 = vmatpush1.bf16.msra.mxu0 %v2629
    %2903 = vmatprep.subr.bf16.mxu0 %v2628
    %2904 = vmatpush1.bf16.msra.mxu0 %v2627
    %2905 = vmatprep.subr.bf16.mxu0 %v2626
    %2906 = vmatpush1.bf16.msra.mxu0 %v2625
    %2907 = vmatprep.subr.bf16.mxu0 %v2624
    %2908 = vmatpush1.bf16.msra.mxu0 %v2623
    %2909 = vmatprep.subr.bf16.mxu0 %v2622
    %2910 = vmatpush1.bf16.msra.mxu0 %v2621
    %2911 = vmatprep.subr.bf16.mxu0 %v2652
    %2912 = vmatpush2.bf16.msra.mxu0 %v2651
    %2913 = vmatprep.subr.bf16.mxu0 %v2650
    %2914 = vmatpush2.bf16.msra.mxu0 %v2649
    %2915 = vmatprep.subr.bf16.mxu0 %v2648
    %2916 = vmatpush2.bf16.msra.mxu0 %v2647
    %2917 = vmatprep.subr.bf16.mxu0 %v2646
    %2918 = vmatpush2.bf16.msra.mxu0 %v2645
    %2919 = vmatprep.subr.bf16.mxu0 %v2644
    %2920 = vmatpush2.bf16.msra.mxu0 %v2643
    %2921 = vmatprep.subr.bf16.mxu0 %v2642
    %2922 = vmatpush2.bf16.msra.mxu0 %v2641
    %2923 = vmatprep.subr.bf16.mxu0 %v2640
    %2924 = vmatpush2.bf16.msra.mxu0 %v2639
    %2925 = vmatprep.subr.bf16.mxu0 %v2638
    %2926 = vmatpush2.bf16.msra.mxu0 %v2637
    %2927 = vmatprep.mubr.bf16.mxu0 %v2029
    %2928 = vmatmul.mubr.bf16.gmra.mxu0 %v2028
    %v2929 = vpop.f32.mrf.mxu0
    %v2930 = vadd.f32 %v2889, %v2929
    %v2931 = vpop.f32.mrf.mxu0
    %v2932 = vadd.f32 %v2891, %v2931
    %v2933 = vpop.f32.mrf.mxu0
    %v2934 = vpop.f32.mrf.mxu0
    %2935 = vdwg.mxu0
    %2936 = vmatprep.subr.bf16.mxu0 %v2668
    %2937 = vmatpush1.bf16.msra.mxu0 %v2667
    %2938 = vmatprep.subr.bf16.mxu0 %v2666
    %2939 = vmatpush1.bf16.msra.mxu0 %v2665
    %2940 = vmatprep.subr.bf16.mxu0 %v2664
    %2941 = vmatpush1.bf16.msra.mxu0 %v2663
    %2942 = vmatprep.subr.bf16.mxu0 %v2662
    %2943 = vmatpush1.bf16.msra.mxu0 %v2661
    %2944 = vmatprep.subr.bf16.mxu0 %v2660
    %2945 = vmatpush1.bf16.msra.mxu0 %v2659
    %2946 = vmatprep.subr.bf16.mxu0 %v2658
    %2947 = vmatpush1.bf16.msra.mxu0 %v2657
    %2948 = vmatprep.subr.bf16.mxu0 %v2656
    %2949 = vmatpush1.bf16.msra.mxu0 %v2655
    %2950 = vmatprep.subr.bf16.mxu0 %v2654
    %2951 = vmatpush1.bf16.msra.mxu0 %v2653
    %2952 = vmatprep.subr.bf16.mxu0 %v2684
    %2953 = vmatpush2.bf16.msra.mxu0 %v2683
    %2954 = vmatprep.subr.bf16.mxu0 %v2682
    %2955 = vmatpush2.bf16.msra.mxu0 %v2681
    %2956 = vmatprep.subr.bf16.mxu0 %v2680
    %2957 = vmatpush2.bf16.msra.mxu0 %v2679
    %2958 = vmatprep.subr.bf16.mxu0 %v2678
    %2959 = vmatpush2.bf16.msra.mxu0 %v2677
    %2960 = vmatprep.subr.bf16.mxu0 %v2676
    %2961 = vmatpush2.bf16.msra.mxu0 %v2675
    %2962 = vmatprep.subr.bf16.mxu0 %v2674
    %2963 = vmatpush2.bf16.msra.mxu0 %v2673
    %2964 = vmatprep.subr.bf16.mxu0 %v2672
    %2965 = vmatpush2.bf16.msra.mxu0 %v2671
    %2966 = vmatprep.subr.bf16.mxu0 %v2670
    %2967 = vmatpush2.bf16.msra.mxu0 %v2669
    %2968 = vmatprep.mubr.bf16.mxu0 %v2031
    %2969 = vmatmul.mubr.bf16.gmra.mxu0 %v2030
    %v2970 = vpop.f32.mrf.mxu0
    %v2971 = vadd.f32 %v2930, %v2970
    %v2972 = vpop.f32.mrf.mxu0
    %v2973 = vadd.f32 %v2932, %v2972
    %v2974 = vpop.f32.mrf.mxu0
    %v2975 = vpop.f32.mrf.mxu0
    %2976 = vdwg.mxu0
    %vm2977 = vcmp.gt.f32.partialorder %v2971, 0.0
    %vm2978 = vcmp.gt.f32.partialorder %v2973, 0.0
    %v2979 = vmin.f32 %v2971, 0.0
    %v2980 = vmin.f32 %v2973, 0.0
    %v2981 = vmul.f32 %v2979, 1.442695
    %v2982 = vpow.pop %v2981
    %v2983 = vmul.f32 %v2980, 1.442695
    %v2984 = vpow.pop %v2983
    %v2985 = vsub.f32 %v2982, 1.0
    %v2986 = vsub.f32 %v2984, 1.0
    %v2987 = vsel %vm2977, %v2971, %v2985
    %v2988 = vsel %vm2978, %v2973, %v2986
    %v2989 = vpack.c.bf16 %v2987, %v2987
    %v2990 = vpack.c.bf16 %v2988, %v2988
    %v2991 = vld [vmem:[#allocation6] sm:$0xf]
    %v2992 = vld [vmem:[#allocation6 + $0x4] sm:$0xf]
    %v2993 = vld [vmem:[#allocation6 + $0x8] sm:$0xf]
    %v2994 = vld [vmem:[#allocation6 + $0xc] sm:$0xf]
    %v2995 = vld [vmem:[#allocation6 + $0x10] sm:$0xf]
    %v2996 = vld [vmem:[#allocation6 + $0x14] sm:$0xf]
    %v2997 = vld [vmem:[#allocation6 + $0x18] sm:$0xf]
    %v2998 = vld [vmem:[#allocation6 + $0x1c] sm:$0xf]
    %v2999 = vld [vmem:[#allocation6 + $0x20] sm:$0xf]
    %v3000 = vld [vmem:[#allocation6 + $0x24] sm:$0xf]
    %v3001 = vld [vmem:[#allocation6 + $0x28] sm:$0xf]
    %v3002 = vld [vmem:[#allocation6 + $0x2c] sm:$0xf]
    %v3003 = vld [vmem:[#allocation6 + $0x30] sm:$0xf]
    %v3004 = vld [vmem:[#allocation6 + $0x34] sm:$0xf]
    %v3005 = vld [vmem:[#allocation6 + $0x38] sm:$0xf]
    %v3006 = vld [vmem:[#allocation6 + $0x3c] sm:$0xf]
    %v3007 = vld [vmem:[#allocation6 + $0x40] sm:$0xf]
    %v3008 = vld [vmem:[#allocation6 + $0x44] sm:$0xf]
    %v3009 = vld [vmem:[#allocation6 + $0x48] sm:$0xf]
    %v3010 = vld [vmem:[#allocation6 + $0x4c] sm:$0xf]
    %v3011 = vld [vmem:[#allocation6 + $0x50] sm:$0xf]
    %v3012 = vld [vmem:[#allocation6 + $0x54] sm:$0xf]
    %v3013 = vld [vmem:[#allocation6 + $0x58] sm:$0xf]
    %v3014 = vld [vmem:[#allocation6 + $0x5c] sm:$0xf]
    %v3015 = vld [vmem:[#allocation6 + $0x60] sm:$0xf]
    %v3016 = vld [vmem:[#allocation6 + $0x64] sm:$0xf]
    %v3017 = vld [vmem:[#allocation6 + $0x68] sm:$0xf]
    %v3018 = vld [vmem:[#allocation6 + $0x6c] sm:$0xf]
    %v3019 = vld [vmem:[#allocation6 + $0x70] sm:$0xf]
    %v3020 = vld [vmem:[#allocation6 + $0x74] sm:$0xf]
    %v3021 = vld [vmem:[#allocation6 + $0x78] sm:$0xf]
    %v3022 = vld [vmem:[#allocation6 + $0x7c] sm:$0xf]
    %v3023 = vld [vmem:[%s4 + $0x2] sm:$0x1]
    %v3024 = vlaneseq
    %v3025 = vshrl.u32 %v3024, 7
    %v3026 = vsub.s32 0, %v3025
    %v3027 = vrot.slane %v3023, %v3026
    %v3060 = vunpack.c.l.b16 %v2991
    %v3061 = vunpack.c.l.b16 %v2992
    %v3062 = vunpack.c.l.b16 %v2993
    %v3063 = vunpack.c.l.b16 %v2994
    %v3064 = vunpack.c.l.b16 %v2995
    %v3065 = vunpack.c.l.b16 %v2996
    %v3066 = vunpack.c.l.b16 %v2997
    %v3067 = vunpack.c.l.b16 %v2998
    %v3068 = vunpack.c.l.b16 %v2999
    %v3069 = vunpack.c.l.b16 %v3000
    %v3070 = vunpack.c.l.b16 %v3001
    %v3071 = vunpack.c.l.b16 %v3002
    %v3072 = vunpack.c.l.b16 %v3003
    %v3073 = vunpack.c.l.b16 %v3004
    %v3074 = vunpack.c.l.b16 %v3005
    %v3075 = vunpack.c.l.b16 %v3006
    %v3076 = vunpack.c.l.b16 %v3007
    %v3077 = vunpack.c.l.b16 %v3008
    %v3078 = vunpack.c.l.b16 %v3009
    %v3079 = vunpack.c.l.b16 %v3010
    %v3080 = vunpack.c.l.b16 %v3011
    %v3081 = vunpack.c.l.b16 %v3012
    %v3082 = vunpack.c.l.b16 %v3013
    %v3083 = vunpack.c.l.b16 %v3014
    %v3084 = vunpack.c.l.b16 %v3015
    %v3085 = vunpack.c.l.b16 %v3016
    %v3086 = vunpack.c.l.b16 %v3017
    %v3087 = vunpack.c.l.b16 %v3018
    %v3088 = vunpack.c.l.b16 %v3019
    %v3089 = vunpack.c.l.b16 %v3020
    %v3090 = vunpack.c.l.b16 %v3021
    %v3091 = vunpack.c.l.b16 %v3022
    %v3092 = vpack.c.b16 %v3061, %v3060
    %v3093 = vpack.c.b16 %v3063, %v3062
    %v3094 = vpack.c.b16 %v3065, %v3064
    %v3095 = vpack.c.b16 %v3067, %v3066
    %v3096 = vpack.c.b16 %v3069, %v3068
    %v3097 = vpack.c.b16 %v3071, %v3070
    %v3098 = vpack.c.b16 %v3073, %v3072
    %v3099 = vpack.c.b16 %v3075, %v3074
    %v3100 = vpack.c.b16 %v3077, %v3076
    %v3101 = vpack.c.b16 %v3079, %v3078
    %v3102 = vpack.c.b16 %v3081, %v3080
    %v3103 = vpack.c.b16 %v3083, %v3082
    %v3104 = vpack.c.b16 %v3085, %v3084
    %v3105 = vpack.c.b16 %v3087, %v3086
    %v3106 = vpack.c.b16 %v3089, %v3088
    %v3107 = vpack.c.b16 %v3091, %v3090
    %3124 = vmatprep.subr.bf16.mxu0 0
    %3125 = vmatpush1.bf16.msra.mxu0 %v3099
    %3126 = vmatprep.subr.bf16.mxu0 0
    %3127 = vmatpush1.bf16.msra.mxu0 %v3098
    %3128 = vmatprep.subr.bf16.mxu0 0
    %3129 = vmatpush1.bf16.msra.mxu0 %v3097
    %3130 = vmatprep.subr.bf16.mxu0 0
    %3131 = vmatpush1.bf16.msra.mxu0 %v3096
    %3132 = vmatprep.subr.bf16.mxu0 0
    %3133 = vmatpush1.bf16.msra.mxu0 %v3095
    %3134 = vmatprep.subr.bf16.mxu0 0
    %3135 = vmatpush1.bf16.msra.mxu0 %v3094
    %3136 = vmatprep.subr.bf16.mxu0 0
    %3137 = vmatpush1.bf16.msra.mxu0 %v3093
    %3138 = vmatprep.subr.bf16.mxu0 0
    %3139 = vmatpush1.bf16.msra.mxu0 %v3092
    %3140 = vmatprep.subr.bf16.mxu0 0
    %3141 = vmatpush2.bf16.msra.mxu0 %v3107
    %3142 = vmatprep.subr.bf16.mxu0 0
    %3143 = vmatpush2.bf16.msra.mxu0 %v3106
    %3144 = vmatprep.subr.bf16.mxu0 0
    %3145 = vmatpush2.bf16.msra.mxu0 %v3105
    %3146 = vmatprep.subr.bf16.mxu0 0
    %3147 = vmatpush2.bf16.msra.mxu0 %v3104
    %3148 = vmatprep.subr.bf16.mxu0 0
    %3149 = vmatpush2.bf16.msra.mxu0 %v3103
    %3150 = vmatprep.subr.bf16.mxu0 0
    %3151 = vmatpush2.bf16.msra.mxu0 %v3102
    %3152 = vmatprep.subr.bf16.mxu0 0
    %3153 = vmatpush2.bf16.msra.mxu0 %v3101
    %3154 = vmatprep.subr.bf16.mxu0 0
    %3155 = vmatpush2.bf16.msra.mxu0 %v3100
    %3156 = vmatprep.mubr.bf16.mxu0 %v2990
    %3157 = vmatmul.mubr.bf16.gmra.mxu0 %v2989
    %v3158 = vpop.f32.mrf.mxu0
    %v3159 = vadd.f32 %v3027, %v3158
    %v3160 = vpop.f32.mrf.mxu0
    %v3161 = vpop.f32.mrf.mxu0
    %v3162 = vpop.f32.mrf.mxu0
    %3163 = vdwg.mxu0
    %3164 = vst [vmem:[%s5] sm:$0xff] %v3159
    // Predicated region
    $region34: #{eegnet_forward.1} parent=1 // pred_check
      _
    $region35: #{eegnet_forward.1} parent=1 // pred_check_branch
      %3166 = sbr.rel (0) target = $region37
    $region36: #{eegnet_forward.1} parent=1 // pred_region
      _
    $region37: #{eegnet_forward.1} parent=1 // pred_fallthru
      _
    // Predicated region
    $region38: #{eegnet_forward.1} parent=1 // pred_check
      _
    $region39: #{eegnet_forward.1} parent=1 // pred_check_branch
      %3168 = sbr.rel (0) target = $region41
    $region40: #{eegnet_forward.1} parent=1 // pred_region
      _
    $region41: #{eegnet_forward.1} parent=1 // pred_fallthru
      _
    %3169 = vsyncpa [#allocation3], 1
    %3170 = vsyncpa [#allocation5], 1

</llo_original>
